<compile_context>
chip_gen: v5e
topology: v5e:2x2
jax: 0.10.0
libtpu: 0.0.40
codegen_flags: <defaults>
</compile_context>

<pallas_src>
import functools

import jax
import jax.numpy as jnp
from jax.experimental import pallas as pl
from jax.experimental.pallas import tpu as pltpu


def _spatial_attention_kernel(x_ref, h_idx_ref, w_idx_ref, w_ref, b_ref, o_ref,
                              *, kernel_size, height, width, block_n):
    """x_ref/o_ref: (block_n, C, H*W) VMEM tiles; h_idx/w_idx: (1, H*W) int32
    VMEM; w_ref: (2*K*K,) f32 SMEM; b_ref: (1,) f32 SMEM."""
    K = kernel_size
    P = K // 2
    H, W = height, width
    HW = H * W
    KK = K * K

    # ---- channel pooling with f32 accumulation (no f32 copy of x) ---------
    # Per-image pooled rows are stacked into (block_n, HW) maps so the conv
    # phase below runs at block_n/8 sublane occupancy.
    avg_rows, max_rows = [], []
    for b in range(block_n):
        xb = x_ref[b]                                                  # (C, HW)
        avg_rows.append(jnp.mean(xb, axis=0, keepdims=True, dtype=jnp.float32))
        max_rows.append(jnp.max(xb, axis=0, keepdims=True).astype(jnp.float32))
    if block_n == 1:
        avg_pool, max_pool = avg_rows[0], max_rows[0]                  # (1, HW)
    else:
        avg_pool = jnp.concatenate(avg_rows, axis=0)                   # (BN, HW)
        max_pool = jnp.concatenate(max_rows, axis=0)

    # ---- hoisted scalar weights / bias (SMEM reads, once per grid step) ---
    w_avg = [w_ref[i] for i in range(KK)]          # channel 0 = avg pooled map
    w_max = [w_ref[KK + i] for i in range(KK)]     # channel 1 = max pooled map
    bias = b_ref[0]

    h_idx = h_idx_ref[...]                                             # (1, HW)
    w_idx = w_idx_ref[...]                                             # (1, HW)

    # ---- factored SAME conv, column pass -----------------------------------
    # Pre-roll each pooled map by every horizontal offset dw and fold the
    # column-validity (zero padding) mask into the data.  The column index is
    # preserved by the later dh*W row roll, so masking here is equivalent to
    # masking per tap (and must happen BEFORE the row roll).
    avg_cols, max_cols = {}, {}
    for dw in range(-P, P + 1):
        if dw == 0:
            a_s, m_s = avg_pool, max_pool
        else:
            s = (-dw) % HW                          # jnp.roll-style shift (XLU)
            a_s = pltpu.roll(avg_pool, shift=s, axis=1)
            m_s = pltpu.roll(max_pool, shift=s, axis=1)
            ok = (w_idx < (W - dw)) if dw > 0 else (w_idx >= -dw)
            a_s = jnp.where(ok, a_s, 0.0)
            m_s = jnp.where(ok, m_s, 0.0)
        avg_cols[dw] = a_s
        max_cols[dw] = m_s

    # ---- factored SAME conv, row pass ---------------------------------------
    # Per vertical offset dh: VPU-only weighted sum over dw of the pre-masked
    # maps, then a single roll by dh*W and one row mask.
    terms = []
    for kh in range(K):
        dh = kh - P
        parts = []
        for kw in range(K):
            dw = kw - P
            parts.append(w_avg[kh * K + kw] * avg_cols[dw]
                         + w_max[kh * K + kw] * max_cols[dw])
        # pairwise tree sum -> short dependency chain for the VALU scheduler
        while len(parts) > 1:
            parts = [parts[i] + parts[i + 1] if i + 1 < len(parts) else parts[i]
                     for i in range(0, len(parts), 2)]
        row = parts[0]
        if dh != 0:
            row = pltpu.roll(row, shift=(-dh * W) % HW, axis=1)
            ok = (h_idx < (H - dh)) if dh > 0 else (h_idx >= -dh)
            row = jnp.where(ok, row, 0.0)
        terms.append(row)
    while len(terms) > 1:
        terms = [terms[i] + terms[i + 1] if i + 1 < len(terms) else terms[i]
                 for i in range(0, len(terms), 2)]
    conv = terms[0] + bias
    attention = jax.nn.sigmoid(conv)                                   # (BN, HW)

    # ---- broadcasted multiply, lane-dense store -----------------------------
    for b in range(block_n):
        mask_b = attention[b:b + 1].astype(x_ref.dtype)                # (1, HW)
        o_ref[b] = (x_ref[b] * mask_b).astype(o_ref.dtype)


def _pick_block_n(n, c, hw, itemsize, io_budget_bytes=24 * 2**20):
    """Largest sub-batch (<=8, dividing N) whose double-buffered in+out blocks
    fit the VMEM budget while keeping >= min(4, N) grid steps (pipeline depth
    and v7x two-TensorCore sharding)."""
    for bn in (8, 4, 2, 1):
        if n % bn:
            continue
        if n // bn < min(4, n):
            continue
        if 4 * bn * c * hw * itemsize <= io_budget_bytes:
            return bn
    return 1


def spatial_attention(x, conv_w, conv_b, kernel_size=7):
    """x: (N, C, H, W); conv_w: (1, 2, K, K); conv_b: (1,)."""
    assert kernel_size % 2 == 1, "only odd kernel_size matches PyTorch padding=K//2"
    N, C, H, W = x.shape
    HW = H * W
    K = kernel_size
    itemsize = jnp.dtype(x.dtype).itemsize

    block_n = _pick_block_n(N, C, HW, itemsize)
    io_bytes = 4 * block_n * C * HW * itemsize          # 2x in + 2x out buffers
    vmem_limit = int(min(60 * 2**20, max(16 * 2**20, 2 * io_bytes + 2 * 2**20)))

    x3d = x.reshape(N, C, HW)                          # lane-dense last dim
    w_flat = conv_w.reshape(-1).astype(jnp.float32)    # (2*K*K,) [avg taps, max taps]
    b = conv_b.reshape(-1).astype(jnp.float32)         # (1,)

    # Flattened row / column index maps (precomputed: no in-kernel int div/mod).
    h_idx = (jnp.arange(HW, dtype=jnp.int32) // W).reshape(1, HW)
    w_idx = (jnp.arange(HW, dtype=jnp.int32) % W).reshape(1, HW)

    kernel = functools.partial(_spatial_attention_kernel, kernel_size=K,
                               height=H, width=W, block_n=block_n)

    cost = pl.CostEstimate(
        flops=int(N * HW * (4 * K * K + 3 * C)),
        transcendentals=int(N * HW),
        bytes_accessed=int(2 * N * C * HW * itemsize + 2 * K * K * 4 + 2 * HW * 4),
    )

    out3d = pl.pallas_call(
        kernel,
        grid=(N // block_n,),
        in_specs=[
            pl.BlockSpec((block_n, C, HW), lambda n: (n, 0, 0)),  # x tile (VMEM)
            pl.BlockSpec((1, HW), lambda n: (0, 0)),              # h_idx (VMEM)
            pl.BlockSpec((1, HW), lambda n: (0, 0)),              # w_idx (VMEM)
            pl.BlockSpec(memory_space=pltpu.MemorySpace.SMEM),    # conv weights
            pl.BlockSpec(memory_space=pltpu.MemorySpace.SMEM),    # conv bias
        ],
        out_specs=pl.BlockSpec((block_n, C, HW), lambda n: (n, 0, 0)),
        out_shape=jax.ShapeDtypeStruct((N, C, HW), x.dtype),
        compiler_params=pltpu.CompilerParams(
            dimension_semantics=("parallel",),    # shard batch over v7x's 2 TCs
            vmem_limit_bytes=vmem_limit,          # explicit budget (v5e default 16 MiB)
        ),
        cost_estimate=cost,
    )(x3d, h_idx, w_idx, w_flat, b)

    return out3d.reshape(N, C, H, W)


def _reference(x, conv_w, conv_b):
    """Pure-JAX reference matching the PyTorch forward exactly."""
    avg_pool = jnp.mean(x, axis=1, keepdims=True)
    max_pool = jnp.max(x, axis=1, keepdims=True)
    attention = jnp.concatenate([avg_pool, max_pool], axis=1)      # (N, 2, H, W)
    conv = jax.lax.conv_general_dilated(
        attention, conv_w, window_strides=(1, 1), padding="SAME",
        dimension_numbers=("NCHW", "OIHW", "NCHW"))
    conv = conv + conv_b.reshape(1, -1, 1, 1)
    return x * jax.nn.sigmoid(conv)


if __name__ == "__main__":
    key = jax.random.PRNGKey(0)
    kx, kw, kb = jax.random.split(key, 3)

    N, C, H, W = 2, 4, 16, 16
    K = 7

    x = jax.random.normal(kx, (N, C, H, W), dtype=jnp.float32)

    # Deterministic parameter init matching nn.Conv2d default (kaiming-uniform style).
    fan_in = 2 * K * K
    bound = 1.0 / (fan_in ** 0.5)
    conv_w = jax.random.uniform(kw, (1, 2, K, K), jnp.float32, -bound, bound)
    conv_b = jax.random.uniform(kb, (1,), jnp.float32, -bound, bound)

    out = spatial_attention(x, conv_w, conv_b, kernel_size=K)
    out = jax.block_until_ready(out)

    ref = jax.block_until_ready(_reference(x, conv_w, conv_b))
    assert out.shape == (N, C, H, W)
    assert jnp.allclose(out, ref, atol=1e-5, rtol=1e-5)

    print("KERNEL_OK")
</pallas_src>

<mosaic_0001>
module attributes {stable_mosaic.version = 11 : i64} {
  func.func @_spatial_attention_kernel(%arg0: i32, %arg1: memref<1x4x256xf32, #tpu.memory_space<vmem>>, %arg2: memref<1x256xi32, #tpu.memory_space<vmem>>, %arg3: memref<1x256xi32, #tpu.memory_space<vmem>>, %arg4: memref<98xf32, #tpu.memory_space<smem>>, %arg5: memref<1xf32, #tpu.memory_space<smem>>, %arg6: memref<1x4x256xf32, #tpu.memory_space<vmem>>) attributes {dimension_semantics = [#tpu.dimension_semantics<parallel>], iteration_bounds = array<i64: 2>, scalar_prefetch = 0 : i64, scratch_operands = 0 : i64, tpu.core_type = #tpu.core_type<tc>, window_params = [{transform_indices = @transform_0, window_bounds = array<i64: 1, 4, 256>}, {pipeline_mode = #tpu.pipeline_mode<synchronous>, transform_indices = @transform_1, window_bounds = array<i64: 1, 256>}, {pipeline_mode = #tpu.pipeline_mode<synchronous>, transform_indices = @transform_2, window_bounds = array<i64: 1, 256>}, {transform_indices = @transform_3, window_bounds = array<i64: 98>}, {transform_indices = @transform_4, window_bounds = array<i64: 1>}, {transform_indices = @transform_5, window_bounds = array<i64: 1, 4, 256>}]} {
    %c0 = arith.constant 0 : index
    %c0_0 = arith.constant 0 : index
    %c0_1 = arith.constant 0 : index
    %0 = vector.load %arg1[%c0, %c0_0, %c0_1] : memref<1x4x256xf32, #tpu.memory_space<vmem>>, vector<1x4x256xf32>
    %1 = vector.shape_cast %0 : vector<1x4x256xf32> to vector<4x256xf32>
    %cst = arith.constant dense<0.000000e+00> : vector<256xf32>
    %2 = vector.multi_reduction <add>, %1, %cst [0] : vector<4x256xf32> to vector<256xf32>
    %3 = vector.shape_cast %2 : vector<256xf32> to vector<1x256xf32>
    %cst_2 = arith.constant 4.000000e+00 : f32
    %4 = vector.broadcast %cst_2 : f32 to vector<1x256xf32>
    %5 = arith.divf %3, %4 : vector<1x256xf32>
    %cst_3 = arith.constant dense<0xFF800000> : vector<256xf32>
    %6 = vector.multi_reduction <maximumf>, %1, %cst_3 [0] : vector<4x256xf32> to vector<256xf32>
    %7 = vector.shape_cast %6 : vector<256xf32> to vector<1x256xf32>
    %c0_4 = arith.constant 0 : index
    %8 = memref.load %arg4[%c0_4] : memref<98xf32, #tpu.memory_space<smem>>
    %c1 = arith.constant 1 : index
    %9 = memref.load %arg4[%c1] : memref<98xf32, #tpu.memory_space<smem>>
    %c2 = arith.constant 2 : index
    %10 = memref.load %arg4[%c2] : memref<98xf32, #tpu.memory_space<smem>>
    %c3 = arith.constant 3 : index
    %11 = memref.load %arg4[%c3] : memref<98xf32, #tpu.memory_space<smem>>
    %c4 = arith.constant 4 : index
    %12 = memref.load %arg4[%c4] : memref<98xf32, #tpu.memory_space<smem>>
    %c5 = arith.constant 5 : index
    %13 = memref.load %arg4[%c5] : memref<98xf32, #tpu.memory_space<smem>>
    %c6 = arith.constant 6 : index
    %14 = memref.load %arg4[%c6] : memref<98xf32, #tpu.memory_space<smem>>
    %c7 = arith.constant 7 : index
    %15 = memref.load %arg4[%c7] : memref<98xf32, #tpu.memory_space<smem>>
    %c8 = arith.constant 8 : index
    %16 = memref.load %arg4[%c8] : memref<98xf32, #tpu.memory_space<smem>>
    %c9 = arith.constant 9 : index
    %17 = memref.load %arg4[%c9] : memref<98xf32, #tpu.memory_space<smem>>
    %c10 = arith.constant 10 : index
    %18 = memref.load %arg4[%c10] : memref<98xf32, #tpu.memory_space<smem>>
    %c11 = arith.constant 11 : index
    %19 = memref.load %arg4[%c11] : memref<98xf32, #tpu.memory_space<smem>>
    %c12 = arith.constant 12 : index
    %20 = memref.load %arg4[%c12] : memref<98xf32, #tpu.memory_space<smem>>
    %c13 = arith.constant 13 : index
    %21 = memref.load %arg4[%c13] : memref<98xf32, #tpu.memory_space<smem>>
    %c14 = arith.constant 14 : index
    %22 = memref.load %arg4[%c14] : memref<98xf32, #tpu.memory_space<smem>>
    %c15 = arith.constant 15 : index
    %23 = memref.load %arg4[%c15] : memref<98xf32, #tpu.memory_space<smem>>
    %c16 = arith.constant 16 : index
    %24 = memref.load %arg4[%c16] : memref<98xf32, #tpu.memory_space<smem>>
    %c17 = arith.constant 17 : index
    %25 = memref.load %arg4[%c17] : memref<98xf32, #tpu.memory_space<smem>>
    %c18 = arith.constant 18 : index
    %26 = memref.load %arg4[%c18] : memref<98xf32, #tpu.memory_space<smem>>
    %c19 = arith.constant 19 : index
    %27 = memref.load %arg4[%c19] : memref<98xf32, #tpu.memory_space<smem>>
    %c20 = arith.constant 20 : index
    %28 = memref.load %arg4[%c20] : memref<98xf32, #tpu.memory_space<smem>>
    %c21 = arith.constant 21 : index
    %29 = memref.load %arg4[%c21] : memref<98xf32, #tpu.memory_space<smem>>
    %c22 = arith.constant 22 : index
    %30 = memref.load %arg4[%c22] : memref<98xf32, #tpu.memory_space<smem>>
    %c23 = arith.constant 23 : index
    %31 = memref.load %arg4[%c23] : memref<98xf32, #tpu.memory_space<smem>>
    %c24 = arith.constant 24 : index
    %32 = memref.load %arg4[%c24] : memref<98xf32, #tpu.memory_space<smem>>
    %c25 = arith.constant 25 : index
    %33 = memref.load %arg4[%c25] : memref<98xf32, #tpu.memory_space<smem>>
    %c26 = arith.constant 26 : index
    %34 = memref.load %arg4[%c26] : memref<98xf32, #tpu.memory_space<smem>>
    %c27 = arith.constant 27 : index
    %35 = memref.load %arg4[%c27] : memref<98xf32, #tpu.memory_space<smem>>
    %c28 = arith.constant 28 : index
    %36 = memref.load %arg4[%c28] : memref<98xf32, #tpu.memory_space<smem>>
    %c29 = arith.constant 29 : index
    %37 = memref.load %arg4[%c29] : memref<98xf32, #tpu.memory_space<smem>>
    %c30 = arith.constant 30 : index
    %38 = memref.load %arg4[%c30] : memref<98xf32, #tpu.memory_space<smem>>
    %c31 = arith.constant 31 : index
    %39 = memref.load %arg4[%c31] : memref<98xf32, #tpu.memory_space<smem>>
    %c32 = arith.constant 32 : index
    %40 = memref.load %arg4[%c32] : memref<98xf32, #tpu.memory_space<smem>>
    %c33 = arith.constant 33 : index
    %41 = memref.load %arg4[%c33] : memref<98xf32, #tpu.memory_space<smem>>
    %c34 = arith.constant 34 : index
    %42 = memref.load %arg4[%c34] : memref<98xf32, #tpu.memory_space<smem>>
    %c35 = arith.constant 35 : index
    %43 = memref.load %arg4[%c35] : memref<98xf32, #tpu.memory_space<smem>>
    %c36 = arith.constant 36 : index
    %44 = memref.load %arg4[%c36] : memref<98xf32, #tpu.memory_space<smem>>
    %c37 = arith.constant 37 : index
    %45 = memref.load %arg4[%c37] : memref<98xf32, #tpu.memory_space<smem>>
    %c38 = arith.constant 38 : index
    %46 = memref.load %arg4[%c38] : memref<98xf32, #tpu.memory_space<smem>>
    %c39 = arith.constant 39 : index
    %47 = memref.load %arg4[%c39] : memref<98xf32, #tpu.memory_space<smem>>
    %c40 = arith.constant 40 : index
    %48 = memref.load %arg4[%c40] : memref<98xf32, #tpu.memory_space<smem>>
    %c41 = arith.constant 41 : index
    %49 = memref.load %arg4[%c41] : memref<98xf32, #tpu.memory_space<smem>>
    %c42 = arith.constant 42 : index
    %50 = memref.load %arg4[%c42] : memref<98xf32, #tpu.memory_space<smem>>
    %c43 = arith.constant 43 : index
    %51 = memref.load %arg4[%c43] : memref<98xf32, #tpu.memory_space<smem>>
    %c44 = arith.constant 44 : index
    %52 = memref.load %arg4[%c44] : memref<98xf32, #tpu.memory_space<smem>>
    %c45 = arith.constant 45 : index
    %53 = memref.load %arg4[%c45] : memref<98xf32, #tpu.memory_space<smem>>
    %c46 = arith.constant 46 : index
    %54 = memref.load %arg4[%c46] : memref<98xf32, #tpu.memory_space<smem>>
    %c47 = arith.constant 47 : index
    %55 = memref.load %arg4[%c47] : memref<98xf32, #tpu.memory_space<smem>>
    %c48 = arith.constant 48 : index
    %56 = memref.load %arg4[%c48] : memref<98xf32, #tpu.memory_space<smem>>
    %c49 = arith.constant 49 : index
    %57 = memref.load %arg4[%c49] : memref<98xf32, #tpu.memory_space<smem>>
    %c50 = arith.constant 50 : index
    %58 = memref.load %arg4[%c50] : memref<98xf32, #tpu.memory_space<smem>>
    %c51 = arith.constant 51 : index
    %59 = memref.load %arg4[%c51] : memref<98xf32, #tpu.memory_space<smem>>
    %c52 = arith.constant 52 : index
    %60 = memref.load %arg4[%c52] : memref<98xf32, #tpu.memory_space<smem>>
    %c53 = arith.constant 53 : index
    %61 = memref.load %arg4[%c53] : memref<98xf32, #tpu.memory_space<smem>>
    %c54 = arith.constant 54 : index
    %62 = memref.load %arg4[%c54] : memref<98xf32, #tpu.memory_space<smem>>
    %c55 = arith.constant 55 : index
    %63 = memref.load %arg4[%c55] : memref<98xf32, #tpu.memory_space<smem>>
    %c56 = arith.constant 56 : index
    %64 = memref.load %arg4[%c56] : memref<98xf32, #tpu.memory_space<smem>>
    %c57 = arith.constant 57 : index
    %65 = memref.load %arg4[%c57] : memref<98xf32, #tpu.memory_space<smem>>
    %c58 = arith.constant 58 : index
    %66 = memref.load %arg4[%c58] : memref<98xf32, #tpu.memory_space<smem>>
    %c59 = arith.constant 59 : index
    %67 = memref.load %arg4[%c59] : memref<98xf32, #tpu.memory_space<smem>>
    %c60 = arith.constant 60 : index
    %68 = memref.load %arg4[%c60] : memref<98xf32, #tpu.memory_space<smem>>
    %c61 = arith.constant 61 : index
    %69 = memref.load %arg4[%c61] : memref<98xf32, #tpu.memory_space<smem>>
    %c62 = arith.constant 62 : index
    %70 = memref.load %arg4[%c62] : memref<98xf32, #tpu.memory_space<smem>>
    %c63 = arith.constant 63 : index
    %71 = memref.load %arg4[%c63] : memref<98xf32, #tpu.memory_space<smem>>
    %c64 = arith.constant 64 : index
    %72 = memref.load %arg4[%c64] : memref<98xf32, #tpu.memory_space<smem>>
    %c65 = arith.constant 65 : index
    %73 = memref.load %arg4[%c65] : memref<98xf32, #tpu.memory_space<smem>>
    %c66 = arith.constant 66 : index
    %74 = memref.load %arg4[%c66] : memref<98xf32, #tpu.memory_space<smem>>
    %c67 = arith.constant 67 : index
    %75 = memref.load %arg4[%c67] : memref<98xf32, #tpu.memory_space<smem>>
    %c68 = arith.constant 68 : index
    %76 = memref.load %arg4[%c68] : memref<98xf32, #tpu.memory_space<smem>>
    %c69 = arith.constant 69 : index
    %77 = memref.load %arg4[%c69] : memref<98xf32, #tpu.memory_space<smem>>
    %c70 = arith.constant 70 : index
    %78 = memref.load %arg4[%c70] : memref<98xf32, #tpu.memory_space<smem>>
    %c71 = arith.constant 71 : index
    %79 = memref.load %arg4[%c71] : memref<98xf32, #tpu.memory_space<smem>>
    %c72 = arith.constant 72 : index
    %80 = memref.load %arg4[%c72] : memref<98xf32, #tpu.memory_space<smem>>
    %c73 = arith.constant 73 : index
    %81 = memref.load %arg4[%c73] : memref<98xf32, #tpu.memory_space<smem>>
    %c74 = arith.constant 74 : index
    %82 = memref.load %arg4[%c74] : memref<98xf32, #tpu.memory_space<smem>>
    %c75 = arith.constant 75 : index
    %83 = memref.load %arg4[%c75] : memref<98xf32, #tpu.memory_space<smem>>
    %c76 = arith.constant 76 : index
    %84 = memref.load %arg4[%c76] : memref<98xf32, #tpu.memory_space<smem>>
    %c77 = arith.constant 77 : index
    %85 = memref.load %arg4[%c77] : memref<98xf32, #tpu.memory_space<smem>>
    %c78 = arith.constant 78 : index
    %86 = memref.load %arg4[%c78] : memref<98xf32, #tpu.memory_space<smem>>
    %c79 = arith.constant 79 : index
    %87 = memref.load %arg4[%c79] : memref<98xf32, #tpu.memory_space<smem>>
    %c80 = arith.constant 80 : index
    %88 = memref.load %arg4[%c80] : memref<98xf32, #tpu.memory_space<smem>>
    %c81 = arith.constant 81 : index
    %89 = memref.load %arg4[%c81] : memref<98xf32, #tpu.memory_space<smem>>
    %c82 = arith.constant 82 : index
    %90 = memref.load %arg4[%c82] : memref<98xf32, #tpu.memory_space<smem>>
    %c83 = arith.constant 83 : index
    %91 = memref.load %arg4[%c83] : memref<98xf32, #tpu.memory_space<smem>>
    %c84 = arith.constant 84 : index
    %92 = memref.load %arg4[%c84] : memref<98xf32, #tpu.memory_space<smem>>
    %c85 = arith.constant 85 : index
    %93 = memref.load %arg4[%c85] : memref<98xf32, #tpu.memory_space<smem>>
    %c86 = arith.constant 86 : index
    %94 = memref.load %arg4[%c86] : memref<98xf32, #tpu.memory_space<smem>>
    %c87 = arith.constant 87 : index
    %95 = memref.load %arg4[%c87] : memref<98xf32, #tpu.memory_space<smem>>
    %c88 = arith.constant 88 : index
    %96 = memref.load %arg4[%c88] : memref<98xf32, #tpu.memory_space<smem>>
    %c89 = arith.constant 89 : index
    %97 = memref.load %arg4[%c89] : memref<98xf32, #tpu.memory_space<smem>>
    %c90 = arith.constant 90 : index
    %98 = memref.load %arg4[%c90] : memref<98xf32, #tpu.memory_space<smem>>
    %c91 = arith.constant 91 : index
    %99 = memref.load %arg4[%c91] : memref<98xf32, #tpu.memory_space<smem>>
    %c92 = arith.constant 92 : index
    %100 = memref.load %arg4[%c92] : memref<98xf32, #tpu.memory_space<smem>>
    %c93 = arith.constant 93 : index
    %101 = memref.load %arg4[%c93] : memref<98xf32, #tpu.memory_space<smem>>
    %c94 = arith.constant 94 : index
    %102 = memref.load %arg4[%c94] : memref<98xf32, #tpu.memory_space<smem>>
    %c95 = arith.constant 95 : index
    %103 = memref.load %arg4[%c95] : memref<98xf32, #tpu.memory_space<smem>>
    %c96 = arith.constant 96 : index
    %104 = memref.load %arg4[%c96] : memref<98xf32, #tpu.memory_space<smem>>
    %c97 = arith.constant 97 : index
    %105 = memref.load %arg4[%c97] : memref<98xf32, #tpu.memory_space<smem>>
    %c0_5 = arith.constant 0 : index
    %106 = memref.load %arg5[%c0_5] : memref<1xf32, #tpu.memory_space<smem>>
    %c0_6 = arith.constant 0 : index
    %c0_7 = arith.constant 0 : index
    %107 = vector.load %arg2[%c0_6, %c0_7] : memref<1x256xi32, #tpu.memory_space<vmem>>, vector<1x256xi32>
    %c0_8 = arith.constant 0 : index
    %c0_9 = arith.constant 0 : index
    %108 = vector.load %arg3[%c0_8, %c0_9] : memref<1x256xi32, #tpu.memory_space<vmem>>, vector<1x256xi32>
    %c3_i32 = arith.constant 3 : i32
    %109 = tpu.dynamic_rotate %5 by %c3_i32 dim 1 : vector<1x256xf32>, i32 -> vector<1x256xf32>
    %c3_i32_10 = arith.constant 3 : i32
    %110 = tpu.dynamic_rotate %7 by %c3_i32_10 dim 1 : vector<1x256xf32>, i32 -> vector<1x256xf32>
    %c3_i32_11 = arith.constant 3 : i32
    %111 = vector.broadcast %c3_i32_11 : i32 to vector<1x256xi32>
    %112 = arith.cmpi sge, %108, %111 : vector<1x256xi32>
    %cst_12 = arith.constant 0.000000e+00 : f32
    %113 = vector.broadcast %cst_12 : f32 to vector<1x256xf32>
    %114 = arith.select %112, %109, %113 : vector<1x256xi1>, vector<1x256xf32>
    %cst_13 = arith.constant 0.000000e+00 : f32
    %115 = vector.broadcast %cst_13 : f32 to vector<1x256xf32>
    %116 = arith.select %112, %110, %115 : vector<1x256xi1>, vector<1x256xf32>
    %c2_i32 = arith.constant 2 : i32
    %117 = tpu.dynamic_rotate %5 by %c2_i32 dim 1 : vector<1x256xf32>, i32 -> vector<1x256xf32>
    %c2_i32_14 = arith.constant 2 : i32
    %118 = tpu.dynamic_rotate %7 by %c2_i32_14 dim 1 : vector<1x256xf32>, i32 -> vector<1x256xf32>
    %c2_i32_15 = arith.constant 2 : i32
    %119 = vector.broadcast %c2_i32_15 : i32 to vector<1x256xi32>
    %120 = arith.cmpi sge, %108, %119 : vector<1x256xi32>
    %cst_16 = arith.constant 0.000000e+00 : f32
    %121 = vector.broadcast %cst_16 : f32 to vector<1x256xf32>
    %122 = arith.select %120, %117, %121 : vector<1x256xi1>, vector<1x256xf32>
    %cst_17 = arith.constant 0.000000e+00 : f32
    %123 = vector.broadcast %cst_17 : f32 to vector<1x256xf32>
    %124 = arith.select %120, %118, %123 : vector<1x256xi1>, vector<1x256xf32>
    %c1_i32 = arith.constant 1 : i32
    %125 = tpu.dynamic_rotate %5 by %c1_i32 dim 1 : vector<1x256xf32>, i32 -> vector<1x256xf32>
    %c1_i32_18 = arith.constant 1 : i32
    %126 = tpu.dynamic_rotate %7 by %c1_i32_18 dim 1 : vector<1x256xf32>, i32 -> vector<1x256xf32>
    %c1_i32_19 = arith.constant 1 : i32
    %127 = vector.broadcast %c1_i32_19 : i32 to vector<1x256xi32>
    %128 = arith.cmpi sge, %108, %127 : vector<1x256xi32>
    %cst_20 = arith.constant 0.000000e+00 : f32
    %129 = vector.broadcast %cst_20 : f32 to vector<1x256xf32>
    %130 = arith.select %128, %125, %129 : vector<1x256xi1>, vector<1x256xf32>
    %cst_21 = arith.constant 0.000000e+00 : f32
    %131 = vector.broadcast %cst_21 : f32 to vector<1x256xf32>
    %132 = arith.select %128, %126, %131 : vector<1x256xi1>, vector<1x256xf32>
    %c255_i32 = arith.constant 255 : i32
    %133 = tpu.dynamic_rotate %5 by %c255_i32 dim 1 : vector<1x256xf32>, i32 -> vector<1x256xf32>
    %c255_i32_22 = arith.constant 255 : i32
    %134 = tpu.dynamic_rotate %7 by %c255_i32_22 dim 1 : vector<1x256xf32>, i32 -> vector<1x256xf32>
    %c15_i32 = arith.constant 15 : i32
    %135 = vector.broadcast %c15_i32 : i32 to vector<1x256xi32>
    %136 = arith.cmpi slt, %108, %135 : vector<1x256xi32>
    %cst_23 = arith.constant 0.000000e+00 : f32
    %137 = vector.broadcast %cst_23 : f32 to vector<1x256xf32>
    %138 = arith.select %136, %133, %137 : vector<1x256xi1>, vector<1x256xf32>
    %cst_24 = arith.constant 0.000000e+00 : f32
    %139 = vector.broadcast %cst_24 : f32 to vector<1x256xf32>
    %140 = arith.select %136, %134, %139 : vector<1x256xi1>, vector<1x256xf32>
    %c254_i32 = arith.constant 254 : i32
    %141 = tpu.dynamic_rotate %5 by %c254_i32 dim 1 : vector<1x256xf32>, i32 -> vector<1x256xf32>
    %c254_i32_25 = arith.constant 254 : i32
    %142 = tpu.dynamic_rotate %7 by %c254_i32_25 dim 1 : vector<1x256xf32>, i32 -> vector<1x256xf32>
    %c14_i32 = arith.constant 14 : i32
    %143 = vector.broadcast %c14_i32 : i32 to vector<1x256xi32>
    %144 = arith.cmpi slt, %108, %143 : vector<1x256xi32>
    %cst_26 = arith.constant 0.000000e+00 : f32
    %145 = vector.broadcast %cst_26 : f32 to vector<1x256xf32>
    %146 = arith.select %144, %141, %145 : vector<1x256xi1>, vector<1x256xf32>
    %cst_27 = arith.constant 0.000000e+00 : f32
    %147 = vector.broadcast %cst_27 : f32 to vector<1x256xf32>
    %148 = arith.select %144, %142, %147 : vector<1x256xi1>, vector<1x256xf32>
    %c253_i32 = arith.constant 253 : i32
    %149 = tpu.dynamic_rotate %5 by %c253_i32 dim 1 : vector<1x256xf32>, i32 -> vector<1x256xf32>
    %c253_i32_28 = arith.constant 253 : i32
    %150 = tpu.dynamic_rotate %7 by %c253_i32_28 dim 1 : vector<1x256xf32>, i32 -> vector<1x256xf32>
    %c13_i32 = arith.constant 13 : i32
    %151 = vector.broadcast %c13_i32 : i32 to vector<1x256xi32>
    %152 = arith.cmpi slt, %108, %151 : vector<1x256xi32>
    %cst_29 = arith.constant 0.000000e+00 : f32
    %153 = vector.broadcast %cst_29 : f32 to vector<1x256xf32>
    %154 = arith.select %152, %149, %153 : vector<1x256xi1>, vector<1x256xf32>
    %cst_30 = arith.constant 0.000000e+00 : f32
    %155 = vector.broadcast %cst_30 : f32 to vector<1x256xf32>
    %156 = arith.select %152, %150, %155 : vector<1x256xi1>, vector<1x256xf32>
    %157 = vector.broadcast %8 : f32 to vector<1x256xf32>
    %158 = arith.mulf %157, %114 : vector<1x256xf32>
    %159 = vector.broadcast %57 : f32 to vector<1x256xf32>
    %160 = arith.mulf %159, %116 : vector<1x256xf32>
    %161 = arith.addf %158, %160 : vector<1x256xf32>
    %162 = vector.broadcast %9 : f32 to vector<1x256xf32>
    %163 = arith.mulf %162, %122 : vector<1x256xf32>
    %164 = vector.broadcast %58 : f32 to vector<1x256xf32>
    %165 = arith.mulf %164, %124 : vector<1x256xf32>
    %166 = arith.addf %163, %165 : vector<1x256xf32>
    %167 = vector.broadcast %10 : f32 to vector<1x256xf32>
    %168 = arith.mulf %167, %130 : vector<1x256xf32>
    %169 = vector.broadcast %59 : f32 to vector<1x256xf32>
    %170 = arith.mulf %169, %132 : vector<1x256xf32>
    %171 = arith.addf %168, %170 : vector<1x256xf32>
    %172 = vector.broadcast %11 : f32 to vector<1x256xf32>
    %173 = arith.mulf %172, %5 : vector<1x256xf32>
    %174 = vector.broadcast %60 : f32 to vector<1x256xf32>
    %175 = arith.mulf %174, %7 : vector<1x256xf32>
    %176 = arith.addf %173, %175 : vector<1x256xf32>
    %177 = vector.broadcast %12 : f32 to vector<1x256xf32>
    %178 = arith.mulf %177, %138 : vector<1x256xf32>
    %179 = vector.broadcast %61 : f32 to vector<1x256xf32>
    %180 = arith.mulf %179, %140 : vector<1x256xf32>
    %181 = arith.addf %178, %180 : vector<1x256xf32>
    %182 = vector.broadcast %13 : f32 to vector<1x256xf32>
    %183 = arith.mulf %182, %146 : vector<1x256xf32>
    %184 = vector.broadcast %62 : f32 to vector<1x256xf32>
    %185 = arith.mulf %184, %148 : vector<1x256xf32>
    %186 = arith.addf %183, %185 : vector<1x256xf32>
    %187 = vector.broadcast %14 : f32 to vector<1x256xf32>
    %188 = arith.mulf %187, %154 : vector<1x256xf32>
    %189 = vector.broadcast %63 : f32 to vector<1x256xf32>
    %190 = arith.mulf %189, %156 : vector<1x256xf32>
    %191 = arith.addf %188, %190 : vector<1x256xf32>
    %192 = arith.addf %161, %166 : vector<1x256xf32>
    %193 = arith.addf %171, %176 : vector<1x256xf32>
    %194 = arith.addf %181, %186 : vector<1x256xf32>
    %195 = arith.addf %192, %193 : vector<1x256xf32>
    %196 = arith.addf %194, %191 : vector<1x256xf32>
    %197 = arith.addf %195, %196 : vector<1x256xf32>
    %c48_i32 = arith.constant 48 : i32
    %198 = tpu.dynamic_rotate %197 by %c48_i32 dim 1 : vector<1x256xf32>, i32 -> vector<1x256xf32>
    %c3_i32_31 = arith.constant 3 : i32
    %199 = vector.broadcast %c3_i32_31 : i32 to vector<1x256xi32>
    %200 = arith.cmpi sge, %107, %199 : vector<1x256xi32>
    %cst_32 = arith.constant 0.000000e+00 : f32
    %201 = vector.broadcast %cst_32 : f32 to vector<1x256xf32>
    %202 = arith.select %200, %198, %201 : vector<1x256xi1>, vector<1x256xf32>
    %203 = vector.broadcast %15 : f32 to vector<1x256xf32>
    %204 = arith.mulf %203, %114 : vector<1x256xf32>
    %205 = vector.broadcast %64 : f32 to vector<1x256xf32>
    %206 = arith.mulf %205, %116 : vector<1x256xf32>
    %207 = arith.addf %204, %206 : vector<1x256xf32>
    %208 = vector.broadcast %16 : f32 to vector<1x256xf32>
    %209 = arith.mulf %208, %122 : vector<1x256xf32>
    %210 = vector.broadcast %65 : f32 to vector<1x256xf32>
    %211 = arith.mulf %210, %124 : vector<1x256xf32>
    %212 = arith.addf %209, %211 : vector<1x256xf32>
    %213 = vector.broadcast %17 : f32 to vector<1x256xf32>
    %214 = arith.mulf %213, %130 : vector<1x256xf32>
    %215 = vector.broadcast %66 : f32 to vector<1x256xf32>
    %216 = arith.mulf %215, %132 : vector<1x256xf32>
    %217 = arith.addf %214, %216 : vector<1x256xf32>
    %218 = vector.broadcast %18 : f32 to vector<1x256xf32>
    %219 = arith.mulf %218, %5 : vector<1x256xf32>
    %220 = vector.broadcast %67 : f32 to vector<1x256xf32>
    %221 = arith.mulf %220, %7 : vector<1x256xf32>
    %222 = arith.addf %219, %221 : vector<1x256xf32>
    %223 = vector.broadcast %19 : f32 to vector<1x256xf32>
    %224 = arith.mulf %223, %138 : vector<1x256xf32>
    %225 = vector.broadcast %68 : f32 to vector<1x256xf32>
    %226 = arith.mulf %225, %140 : vector<1x256xf32>
    %227 = arith.addf %224, %226 : vector<1x256xf32>
    %228 = vector.broadcast %20 : f32 to vector<1x256xf32>
    %229 = arith.mulf %228, %146 : vector<1x256xf32>
    %230 = vector.broadcast %69 : f32 to vector<1x256xf32>
    %231 = arith.mulf %230, %148 : vector<1x256xf32>
    %232 = arith.addf %229, %231 : vector<1x256xf32>
    %233 = vector.broadcast %21 : f32 to vector<1x256xf32>
    %234 = arith.mulf %233, %154 : vector<1x256xf32>
    %235 = vector.broadcast %70 : f32 to vector<1x256xf32>
    %236 = arith.mulf %235, %156 : vector<1x256xf32>
    %237 = arith.addf %234, %236 : vector<1x256xf32>
    %238 = arith.addf %207, %212 : vector<1x256xf32>
    %239 = arith.addf %217, %222 : vector<1x256xf32>
    %240 = arith.addf %227, %232 : vector<1x256xf32>
    %241 = arith.addf %238, %239 : vector<1x256xf32>
    %242 = arith.addf %240, %237 : vector<1x256xf32>
    %243 = arith.addf %241, %242 : vector<1x256xf32>
    %c32_i32 = arith.constant 32 : i32
    %244 = tpu.dynamic_rotate %243 by %c32_i32 dim 1 : vector<1x256xf32>, i32 -> vector<1x256xf32>
    %c2_i32_33 = arith.constant 2 : i32
    %245 = vector.broadcast %c2_i32_33 : i32 to vector<1x256xi32>
    %246 = arith.cmpi sge, %107, %245 : vector<1x256xi32>
    %cst_34 = arith.constant 0.000000e+00 : f32
    %247 = vector.broadcast %cst_34 : f32 to vector<1x256xf32>
    %248 = arith.select %246, %244, %247 : vector<1x256xi1>, vector<1x256xf32>
    %249 = vector.broadcast %22 : f32 to vector<1x256xf32>
    %250 = arith.mulf %249, %114 : vector<1x256xf32>
    %251 = vector.broadcast %71 : f32 to vector<1x256xf32>
    %252 = arith.mulf %251, %116 : vector<1x256xf32>
    %253 = arith.addf %250, %252 : vector<1x256xf32>
    %254 = vector.broadcast %23 : f32 to vector<1x256xf32>
    %255 = arith.mulf %254, %122 : vector<1x256xf32>
    %256 = vector.broadcast %72 : f32 to vector<1x256xf32>
    %257 = arith.mulf %256, %124 : vector<1x256xf32>
    %258 = arith.addf %255, %257 : vector<1x256xf32>
    %259 = vector.broadcast %24 : f32 to vector<1x256xf32>
    %260 = arith.mulf %259, %130 : vector<1x256xf32>
    %261 = vector.broadcast %73 : f32 to vector<1x256xf32>
    %262 = arith.mulf %261, %132 : vector<1x256xf32>
    %263 = arith.addf %260, %262 : vector<1x256xf32>
    %264 = vector.broadcast %25 : f32 to vector<1x256xf32>
    %265 = arith.mulf %264, %5 : vector<1x256xf32>
    %266 = vector.broadcast %74 : f32 to vector<1x256xf32>
    %267 = arith.mulf %266, %7 : vector<1x256xf32>
    %268 = arith.addf %265, %267 : vector<1x256xf32>
    %269 = vector.broadcast %26 : f32 to vector<1x256xf32>
    %270 = arith.mulf %269, %138 : vector<1x256xf32>
    %271 = vector.broadcast %75 : f32 to vector<1x256xf32>
    %272 = arith.mulf %271, %140 : vector<1x256xf32>
    %273 = arith.addf %270, %272 : vector<1x256xf32>
    %274 = vector.broadcast %27 : f32 to vector<1x256xf32>
    %275 = arith.mulf %274, %146 : vector<1x256xf32>
    %276 = vector.broadcast %76 : f32 to vector<1x256xf32>
    %277 = arith.mulf %276, %148 : vector<1x256xf32>
    %278 = arith.addf %275, %277 : vector<1x256xf32>
    %279 = vector.broadcast %28 : f32 to vector<1x256xf32>
    %280 = arith.mulf %279, %154 : vector<1x256xf32>
    %281 = vector.broadcast %77 : f32 to vector<1x256xf32>
    %282 = arith.mulf %281, %156 : vector<1x256xf32>
    %283 = arith.addf %280, %282 : vector<1x256xf32>
    %284 = arith.addf %253, %258 : vector<1x256xf32>
    %285 = arith.addf %263, %268 : vector<1x256xf32>
    %286 = arith.addf %273, %278 : vector<1x256xf32>
    %287 = arith.addf %284, %285 : vector<1x256xf32>
    %288 = arith.addf %286, %283 : vector<1x256xf32>
    %289 = arith.addf %287, %288 : vector<1x256xf32>
    %c16_i32 = arith.constant 16 : i32
    %290 = tpu.dynamic_rotate %289 by %c16_i32 dim 1 : vector<1x256xf32>, i32 -> vector<1x256xf32>
    %c1_i32_35 = arith.constant 1 : i32
    %291 = vector.broadcast %c1_i32_35 : i32 to vector<1x256xi32>
    %292 = arith.cmpi sge, %107, %291 : vector<1x256xi32>
    %cst_36 = arith.constant 0.000000e+00 : f32
    %293 = vector.broadcast %cst_36 : f32 to vector<1x256xf32>
    %294 = arith.select %292, %290, %293 : vector<1x256xi1>, vector<1x256xf32>
    %295 = vector.broadcast %29 : f32 to vector<1x256xf32>
    %296 = arith.mulf %295, %114 : vector<1x256xf32>
    %297 = vector.broadcast %78 : f32 to vector<1x256xf32>
    %298 = arith.mulf %297, %116 : vector<1x256xf32>
    %299 = arith.addf %296, %298 : vector<1x256xf32>
    %300 = vector.broadcast %30 : f32 to vector<1x256xf32>
    %301 = arith.mulf %300, %122 : vector<1x256xf32>
    %302 = vector.broadcast %79 : f32 to vector<1x256xf32>
    %303 = arith.mulf %302, %124 : vector<1x256xf32>
    %304 = arith.addf %301, %303 : vector<1x256xf32>
    %305 = vector.broadcast %31 : f32 to vector<1x256xf32>
    %306 = arith.mulf %305, %130 : vector<1x256xf32>
    %307 = vector.broadcast %80 : f32 to vector<1x256xf32>
    %308 = arith.mulf %307, %132 : vector<1x256xf32>
    %309 = arith.addf %306, %308 : vector<1x256xf32>
    %310 = vector.broadcast %32 : f32 to vector<1x256xf32>
    %311 = arith.mulf %310, %5 : vector<1x256xf32>
    %312 = vector.broadcast %81 : f32 to vector<1x256xf32>
    %313 = arith.mulf %312, %7 : vector<1x256xf32>
    %314 = arith.addf %311, %313 : vector<1x256xf32>
    %315 = vector.broadcast %33 : f32 to vector<1x256xf32>
    %316 = arith.mulf %315, %138 : vector<1x256xf32>
    %317 = vector.broadcast %82 : f32 to vector<1x256xf32>
    %318 = arith.mulf %317, %140 : vector<1x256xf32>
    %319 = arith.addf %316, %318 : vector<1x256xf32>
    %320 = vector.broadcast %34 : f32 to vector<1x256xf32>
    %321 = arith.mulf %320, %146 : vector<1x256xf32>
    %322 = vector.broadcast %83 : f32 to vector<1x256xf32>
    %323 = arith.mulf %322, %148 : vector<1x256xf32>
    %324 = arith.addf %321, %323 : vector<1x256xf32>
    %325 = vector.broadcast %35 : f32 to vector<1x256xf32>
    %326 = arith.mulf %325, %154 : vector<1x256xf32>
    %327 = vector.broadcast %84 : f32 to vector<1x256xf32>
    %328 = arith.mulf %327, %156 : vector<1x256xf32>
    %329 = arith.addf %326, %328 : vector<1x256xf32>
    %330 = arith.addf %299, %304 : vector<1x256xf32>
    %331 = arith.addf %309, %314 : vector<1x256xf32>
    %332 = arith.addf %319, %324 : vector<1x256xf32>
    %333 = arith.addf %330, %331 : vector<1x256xf32>
    %334 = arith.addf %332, %329 : vector<1x256xf32>
    %335 = arith.addf %333, %334 : vector<1x256xf32>
    %336 = vector.broadcast %36 : f32 to vector<1x256xf32>
    %337 = arith.mulf %336, %114 : vector<1x256xf32>
    %338 = vector.broadcast %85 : f32 to vector<1x256xf32>
    %339 = arith.mulf %338, %116 : vector<1x256xf32>
    %340 = arith.addf %337, %339 : vector<1x256xf32>
    %341 = vector.broadcast %37 : f32 to vector<1x256xf32>
    %342 = arith.mulf %341, %122 : vector<1x256xf32>
    %343 = vector.broadcast %86 : f32 to vector<1x256xf32>
    %344 = arith.mulf %343, %124 : vector<1x256xf32>
    %345 = arith.addf %342, %344 : vector<1x256xf32>
    %346 = vector.broadcast %38 : f32 to vector<1x256xf32>
    %347 = arith.mulf %346, %130 : vector<1x256xf32>
    %348 = vector.broadcast %87 : f32 to vector<1x256xf32>
    %349 = arith.mulf %348, %132 : vector<1x256xf32>
    %350 = arith.addf %347, %349 : vector<1x256xf32>
    %351 = vector.broadcast %39 : f32 to vector<1x256xf32>
    %352 = arith.mulf %351, %5 : vector<1x256xf32>
    %353 = vector.broadcast %88 : f32 to vector<1x256xf32>
    %354 = arith.mulf %353, %7 : vector<1x256xf32>
    %355 = arith.addf %352, %354 : vector<1x256xf32>
    %356 = vector.broadcast %40 : f32 to vector<1x256xf32>
    %357 = arith.mulf %356, %138 : vector<1x256xf32>
    %358 = vector.broadcast %89 : f32 to vector<1x256xf32>
    %359 = arith.mulf %358, %140 : vector<1x256xf32>
    %360 = arith.addf %357, %359 : vector<1x256xf32>
    %361 = vector.broadcast %41 : f32 to vector<1x256xf32>
    %362 = arith.mulf %361, %146 : vector<1x256xf32>
    %363 = vector.broadcast %90 : f32 to vector<1x256xf32>
    %364 = arith.mulf %363, %148 : vector<1x256xf32>
    %365 = arith.addf %362, %364 : vector<1x256xf32>
    %366 = vector.broadcast %42 : f32 to vector<1x256xf32>
    %367 = arith.mulf %366, %154 : vector<1x256xf32>
    %368 = vector.broadcast %91 : f32 to vector<1x256xf32>
    %369 = arith.mulf %368, %156 : vector<1x256xf32>
    %370 = arith.addf %367, %369 : vector<1x256xf32>
    %371 = arith.addf %340, %345 : vector<1x256xf32>
    %372 = arith.addf %350, %355 : vector<1x256xf32>
    %373 = arith.addf %360, %365 : vector<1x256xf32>
    %374 = arith.addf %371, %372 : vector<1x256xf32>
    %375 = arith.addf %373, %370 : vector<1x256xf32>
    %376 = arith.addf %374, %375 : vector<1x256xf32>
    %c240_i32 = arith.constant 240 : i32
    %377 = tpu.dynamic_rotate %376 by %c240_i32 dim 1 : vector<1x256xf32>, i32 -> vector<1x256xf32>
    %c15_i32_37 = arith.constant 15 : i32
    %378 = vector.broadcast %c15_i32_37 : i32 to vector<1x256xi32>
    %379 = arith.cmpi slt, %107, %378 : vector<1x256xi32>
    %cst_38 = arith.constant 0.000000e+00 : f32
    %380 = vector.broadcast %cst_38 : f32 to vector<1x256xf32>
    %381 = arith.select %379, %377, %380 : vector<1x256xi1>, vector<1x256xf32>
    %382 = vector.broadcast %43 : f32 to vector<1x256xf32>
    %383 = arith.mulf %382, %114 : vector<1x256xf32>
    %384 = vector.broadcast %92 : f32 to vector<1x256xf32>
    %385 = arith.mulf %384, %116 : vector<1x256xf32>
    %386 = arith.addf %383, %385 : vector<1x256xf32>
    %387 = vector.broadcast %44 : f32 to vector<1x256xf32>
    %388 = arith.mulf %387, %122 : vector<1x256xf32>
    %389 = vector.broadcast %93 : f32 to vector<1x256xf32>
    %390 = arith.mulf %389, %124 : vector<1x256xf32>
    %391 = arith.addf %388, %390 : vector<1x256xf32>
    %392 = vector.broadcast %45 : f32 to vector<1x256xf32>
    %393 = arith.mulf %392, %130 : vector<1x256xf32>
    %394 = vector.broadcast %94 : f32 to vector<1x256xf32>
    %395 = arith.mulf %394, %132 : vector<1x256xf32>
    %396 = arith.addf %393, %395 : vector<1x256xf32>
    %397 = vector.broadcast %46 : f32 to vector<1x256xf32>
    %398 = arith.mulf %397, %5 : vector<1x256xf32>
    %399 = vector.broadcast %95 : f32 to vector<1x256xf32>
    %400 = arith.mulf %399, %7 : vector<1x256xf32>
    %401 = arith.addf %398, %400 : vector<1x256xf32>
    %402 = vector.broadcast %47 : f32 to vector<1x256xf32>
    %403 = arith.mulf %402, %138 : vector<1x256xf32>
    %404 = vector.broadcast %96 : f32 to vector<1x256xf32>
    %405 = arith.mulf %404, %140 : vector<1x256xf32>
    %406 = arith.addf %403, %405 : vector<1x256xf32>
    %407 = vector.broadcast %48 : f32 to vector<1x256xf32>
    %408 = arith.mulf %407, %146 : vector<1x256xf32>
    %409 = vector.broadcast %97 : f32 to vector<1x256xf32>
    %410 = arith.mulf %409, %148 : vector<1x256xf32>
    %411 = arith.addf %408, %410 : vector<1x256xf32>
    %412 = vector.broadcast %49 : f32 to vector<1x256xf32>
    %413 = arith.mulf %412, %154 : vector<1x256xf32>
    %414 = vector.broadcast %98 : f32 to vector<1x256xf32>
    %415 = arith.mulf %414, %156 : vector<1x256xf32>
    %416 = arith.addf %413, %415 : vector<1x256xf32>
    %417 = arith.addf %386, %391 : vector<1x256xf32>
    %418 = arith.addf %396, %401 : vector<1x256xf32>
    %419 = arith.addf %406, %411 : vector<1x256xf32>
    %420 = arith.addf %417, %418 : vector<1x256xf32>
    %421 = arith.addf %419, %416 : vector<1x256xf32>
    %422 = arith.addf %420, %421 : vector<1x256xf32>
    %c224_i32 = arith.constant 224 : i32
    %423 = tpu.dynamic_rotate %422 by %c224_i32 dim 1 : vector<1x256xf32>, i32 -> vector<1x256xf32>
    %c14_i32_39 = arith.constant 14 : i32
    %424 = vector.broadcast %c14_i32_39 : i32 to vector<1x256xi32>
    %425 = arith.cmpi slt, %107, %424 : vector<1x256xi32>
    %cst_40 = arith.constant 0.000000e+00 : f32
    %426 = vector.broadcast %cst_40 : f32 to vector<1x256xf32>
    %427 = arith.select %425, %423, %426 : vector<1x256xi1>, vector<1x256xf32>
    %428 = vector.broadcast %50 : f32 to vector<1x256xf32>
    %429 = arith.mulf %428, %114 : vector<1x256xf32>
    %430 = vector.broadcast %99 : f32 to vector<1x256xf32>
    %431 = arith.mulf %430, %116 : vector<1x256xf32>
    %432 = arith.addf %429, %431 : vector<1x256xf32>
    %433 = vector.broadcast %51 : f32 to vector<1x256xf32>
    %434 = arith.mulf %433, %122 : vector<1x256xf32>
    %435 = vector.broadcast %100 : f32 to vector<1x256xf32>
    %436 = arith.mulf %435, %124 : vector<1x256xf32>
    %437 = arith.addf %434, %436 : vector<1x256xf32>
    %438 = vector.broadcast %52 : f32 to vector<1x256xf32>
    %439 = arith.mulf %438, %130 : vector<1x256xf32>
    %440 = vector.broadcast %101 : f32 to vector<1x256xf32>
    %441 = arith.mulf %440, %132 : vector<1x256xf32>
    %442 = arith.addf %439, %441 : vector<1x256xf32>
    %443 = vector.broadcast %53 : f32 to vector<1x256xf32>
    %444 = arith.mulf %443, %5 : vector<1x256xf32>
    %445 = vector.broadcast %102 : f32 to vector<1x256xf32>
    %446 = arith.mulf %445, %7 : vector<1x256xf32>
    %447 = arith.addf %444, %446 : vector<1x256xf32>
    %448 = vector.broadcast %54 : f32 to vector<1x256xf32>
    %449 = arith.mulf %448, %138 : vector<1x256xf32>
    %450 = vector.broadcast %103 : f32 to vector<1x256xf32>
    %451 = arith.mulf %450, %140 : vector<1x256xf32>
    %452 = arith.addf %449, %451 : vector<1x256xf32>
    %453 = vector.broadcast %55 : f32 to vector<1x256xf32>
    %454 = arith.mulf %453, %146 : vector<1x256xf32>
    %455 = vector.broadcast %104 : f32 to vector<1x256xf32>
    %456 = arith.mulf %455, %148 : vector<1x256xf32>
    %457 = arith.addf %454, %456 : vector<1x256xf32>
    %458 = vector.broadcast %56 : f32 to vector<1x256xf32>
    %459 = arith.mulf %458, %154 : vector<1x256xf32>
    %460 = vector.broadcast %105 : f32 to vector<1x256xf32>
    %461 = arith.mulf %460, %156 : vector<1x256xf32>
    %462 = arith.addf %459, %461 : vector<1x256xf32>
    %463 = arith.addf %432, %437 : vector<1x256xf32>
    %464 = arith.addf %442, %447 : vector<1x256xf32>
    %465 = arith.addf %452, %457 : vector<1x256xf32>
    %466 = arith.addf %463, %464 : vector<1x256xf32>
    %467 = arith.addf %465, %462 : vector<1x256xf32>
    %468 = arith.addf %466, %467 : vector<1x256xf32>
    %c208_i32 = arith.constant 208 : i32
    %469 = tpu.dynamic_rotate %468 by %c208_i32 dim 1 : vector<1x256xf32>, i32 -> vector<1x256xf32>
    %c13_i32_41 = arith.constant 13 : i32
    %470 = vector.broadcast %c13_i32_41 : i32 to vector<1x256xi32>
    %471 = arith.cmpi slt, %107, %470 : vector<1x256xi32>
    %cst_42 = arith.constant 0.000000e+00 : f32
    %472 = vector.broadcast %cst_42 : f32 to vector<1x256xf32>
    %473 = arith.select %471, %469, %472 : vector<1x256xi1>, vector<1x256xf32>
    %474 = arith.addf %202, %248 : vector<1x256xf32>
    %475 = arith.addf %294, %335 : vector<1x256xf32>
    %476 = arith.addf %381, %427 : vector<1x256xf32>
    %477 = arith.addf %474, %475 : vector<1x256xf32>
    %478 = arith.addf %476, %473 : vector<1x256xf32>
    %479 = arith.addf %477, %478 : vector<1x256xf32>
    %480 = vector.broadcast %106 : f32 to vector<1x256xf32>
    %481 = arith.addf %479, %480 : vector<1x256xf32>
    %482 = arith.negf %481 : vector<1x256xf32>
    %483 = math.exp %482 : vector<1x256xf32>
    %cst_43 = arith.constant 1.000000e+00 : f32
    %484 = vector.broadcast %cst_43 : f32 to vector<1x256xf32>
    %485 = arith.addf %484, %483 : vector<1x256xf32>
    %486 = arith.divf %484, %485 : vector<1x256xf32>
    %c0_44 = arith.constant 0 : index
    %c0_45 = arith.constant 0 : index
    %c0_46 = arith.constant 0 : index
    %487 = vector.load %arg1[%c0_44, %c0_45, %c0_46] : memref<1x4x256xf32, #tpu.memory_space<vmem>>, vector<1x4x256xf32>
    %488 = vector.shape_cast %487 : vector<1x4x256xf32> to vector<4x256xf32>
    %489 = vector.broadcast %486 : vector<1x256xf32> to vector<4x256xf32>
    %490 = arith.mulf %488, %489 : vector<4x256xf32>
    %c0_47 = arith.constant 0 : index
    %c0_48 = arith.constant 0 : index
    %c0_49 = arith.constant 0 : index
    %491 = vector.load %arg6[%c0_47, %c0_48, %c0_49] : memref<1x4x256xf32, #tpu.memory_space<vmem>>, vector<1x4x256xf32>
    %492 = vector.shape_cast %491 : vector<1x4x256xf32> to vector<4x256xf32>
    %493 = vector.shape_cast %490 : vector<4x256xf32> to vector<1x4x256xf32>
    tpu.vector_store %arg6[%c0_47, %c0_48, %c0_49], %493 {strides = array<i32>} : memref<1x4x256xf32, #tpu.memory_space<vmem>>, vector<1x4x256xf32>,
    return
  }
  func.func @transform_0(%arg0: i32) -> (i32, i32, i32) {
    %c0_i32 = arith.constant 0 : i32
    %c0_i32_0 = arith.constant 0 : i32
    %c0_i32_1 = arith.constant 0 : i32
    return %arg0, %c0_i32, %c0_i32_0 : i32, i32, i32
  }
  func.func @transform_1(%arg0: i32) -> (i32, i32) {
    %c0_i32 = arith.constant 0 : i32
    %c0_i32_0 = arith.constant 0 : i32
    %c0_i32_1 = arith.constant 0 : i32
    return %c0_i32, %c0_i32_0 : i32, i32
  }
  func.func @transform_2(%arg0: i32) -> (i32, i32) {
    %c0_i32 = arith.constant 0 : i32
    %c0_i32_0 = arith.constant 0 : i32
    %c0_i32_1 = arith.constant 0 : i32
    return %c0_i32, %c0_i32_0 : i32, i32
  }
  func.func @transform_3(%arg0: i32) -> i32 {
    %c0_i32 = arith.constant 0 : i32
    %c0_i32_0 = arith.constant 0 : i32
    return %c0_i32 : i32
  }
  func.func @transform_4(%arg0: i32) -> i32 {
    %c0_i32 = arith.constant 0 : i32
    %c0_i32_0 = arith.constant 0 : i32
    return %c0_i32 : i32
  }
  func.func @transform_5(%arg0: i32) -> (i32, i32, i32) {
    %c0_i32 = arith.constant 0 : i32
    %c0_i32_0 = arith.constant 0 : i32
    %c0_i32_1 = arith.constant 0 : i32
    return %arg0, %c0_i32, %c0_i32_0 : i32, i32, i32
  }
}

</mosaic_0001>

<llo_original>
// kernel: tpu_custom_call.1
$region0: #{tpu_custom_call.1}
  #allocation0 [shape = 'u32[]', space=smem, size = 0x4, offset = 0x4, fixed_abs, tag = 'smem constant byte address 0x4 - core index']
  #allocation1 [shape = 'u32[72,128]{1,0:T(1,128)}', space=vmem, size = 0x9000, scoped, tag = 'internal scratch']
  #allocation2 [shape = 'f32[1]{0:T(128)S(6)}', space=smem, size = 0x200, scoped, tag = 'scoped memory for tpu_custom_call.1']
  %s0 = inlined_call_operand.hbm [shape: f32[2,4,256], index: 0, kind: input, shape index: {}]
  %s1 = inlined_call_operand.vmem [shape: s32[1,256], index: 1, kind: input, shape index: {}]
  %s2 = inlined_call_operand.hbm [shape: s32[1,256], index: 2, kind: input, shape index: {}]
  %s3 = inlined_call_operand.vmem [shape: f32[98], index: 3, kind: input, shape index: {}]
  %s4 = inlined_call_operand.<no memory space> [shape: f32[1], index: 4, kind: input, shape index: {}]
  %s5 = inlined_call_operand.hbm [shape: f32[2,4,256], index: 5, kind: output, shape index: {}]
  %s6 = sld [smem:[#allocation0]]
  $region65: #{tpu_custom_call.1} parent=0
    _
  %s8 = ssub.s32 1, %s6
  %s9 = scalar_select 0, %s8, %s6
  %10 = sst [smem:[#allocation2]] %s4
  $region1: #{tpu_custom_call.1} parent=0
    #allocation3 [shape = 'u8[8192]{0}', space=vmem, size = 0x2000, scoped, tag = 'input window, operand 0']
    #allocation4 [shape = 's32[2]{0}', space=sflag, size = 0x8, scoped, tag = 'scoped memory for tpu_custom_call.1']
    #allocation5 [shape = 's32[2]{0}', space=sflag, size = 0x8, scoped, tag = 'scoped memory for tpu_custom_call.1']
    #allocation6 [shape = 's32[2]{0}', space=sflag, size = 0x8, scoped, tag = 'scoped memory for tpu_custom_call.1']
    #allocation7 [shape = 'u8[1024]{0}', space=vmem, size = 0x400, scoped, tag = 'input window, operand 2, single buffered']
    #allocation8 [shape = 's32[1]{0}', space=sflag, size = 0x4, scoped, tag = 'scoped memory for tpu_custom_call.1']
    #allocation9 [shape = 'u8[512]{0}', space=smem, size = 0x200, scoped, tag = 'input window, operand 3, single buffered']
    #allocation10 [shape = 'u8[8192]{0}', space=vmem, size = 0x2000, scoped, tag = 'output window, operand 0']
    %11 = vsyncpa [#allocation4], 0
    %s12 = scalar_lea.sflag [#allocation4], 1
    %13 = vsyncpa %s12, 0
    %14 = vsyncpa [#allocation8], 0
    %15 = vsyncpa [#allocation6], 0
    %16 = vsyncpa [#allocation5], 0
    %s17 = scalar_lea.sflag [#allocation5], 1
    %18 = vsyncpa %s17, 0
    loop: start=0, step=1, limit=4
    $region2: #{tpu_custom_call.1} parent=1 // loop_pre_header
      _
    $region3: #{tpu_custom_call.1} parent=1 // loop_header
      %s20 = sphi 0, %s24
      %p21 = scmp.ge.s32.totalorder %s20, 4
      %s30 = sphi 0, %s32
      %s33 = sphi 0, %s30
      %s34 = sphi 0, %s33
      %s50 = sphi 0, %s34
      %s54 = sphi 0, %s54
      %s56 = sphi 0, %s54
      %s57 = sphi 0, %s56
      %s71 = sphi 0, %s57
      %s75 = sphi 0, %s75
      %s77 = sphi 0, %s75
      %s78 = sphi 0, %s77
      %s92 = sphi 0, %s78
      %s96 = sphi 0, %s96
      %s98 = sphi 0, %s96
      %s99 = sphi 0, %s98
      %s113 = sphi 0, %s99
      %s117 = sphi 0, %s117
      %s119 = sphi 0, %s117
      %s120 = sphi 0, %s119
      %s134 = sphi 0, %s120
      %s140 = sphi 0, %s142
      %s143 = sphi 0, %s140
      %s144 = sphi 0, %s143
      %s160 = sphi 0, %s144
    $region4: #{tpu_custom_call.1} parent=1 // loop_header_branch
      %23 = sbr.rel (%p21) target = $region8
    $region5: #{tpu_custom_call.1} parent=1 // loop_body
      %s25 = ssub.s32 %s20, 1
      %s26 = ssub.s32 %s20, 2
      %s27 = sadd.s32 %s20, 1
      %s28 = ssub.s32 %s20, %s27
      %p29 = scmp.eq.s32.totalorder %s28, 0
      %s31 = sadd.s32 %s30, 1
      %s32 = scalar_select %p29, %s30, %s31
      %p35 = pneg %p29
      %p36 = scmp.eq.s32.totalorder %s20, 1
      %p37 = por %p35, %p36
      %p38 = scmp.ne.s32.totalorder %s30, %s33
      %p39 = scmp.eq.s32.totalorder %s20, 0
      %p40 = por %p38, %p39
      %p41 = scmp.ne.s32.totalorder %s30, %s33
      %p42 = scmp.eq.s32.totalorder %s25, 1
      %p43 = por %p41, %p42
      %p44 = scmp.ne.s32.totalorder %s33, %s34
      %p45 = scmp.eq.s32.totalorder %s25, 0
      %p46 = por %p44, %p45
      %p47 = scmp.ne.s32.totalorder %s33, %s34
      %p48 = scmp.eq.s32.totalorder %s26, 1
      %p49 = por %p47, %p48
      %p51 = scmp.ne.s32.totalorder %s34, %s50
      %p52 = scmp.eq.s32.totalorder %s26, 0
      %p53 = por %p51, %p52
      %s55 = sadd.s32 %s54, 1
      %p58 = scmp.eq.s32.totalorder %s20, 1
      %p59 = scmp.ne.s32.totalorder %s54, %s56
      %p60 = scmp.eq.s32.totalorder %s20, 0
      %p61 = por %p59, %p60
      %p62 = scmp.ne.s32.totalorder %s54, %s56
      %p63 = scmp.eq.s32.totalorder %s25, 1
      %p64 = por %p62, %p63
      %p65 = scmp.ne.s32.totalorder %s56, %s57
      %p66 = scmp.eq.s32.totalorder %s25, 0
      %p67 = por %p65, %p66
      %p68 = scmp.ne.s32.totalorder %s56, %s57
      %p69 = scmp.eq.s32.totalorder %s26, 1
      %p70 = por %p68, %p69
      %p72 = scmp.ne.s32.totalorder %s57, %s71
      %p73 = scmp.eq.s32.totalorder %s26, 0
      %p74 = por %p72, %p73
      %s76 = sadd.s32 %s75, 1
      %p79 = scmp.eq.s32.totalorder %s20, 1
      %p80 = scmp.ne.s32.totalorder %s75, %s77
      %p81 = scmp.eq.s32.totalorder %s20, 0
      %p82 = por %p80, %p81
      %p83 = scmp.ne.s32.totalorder %s75, %s77
      %p84 = scmp.eq.s32.totalorder %s25, 1
      %p85 = por %p83, %p84
      %p86 = scmp.ne.s32.totalorder %s77, %s78
      %p87 = scmp.eq.s32.totalorder %s25, 0
      %p88 = por %p86, %p87
      %p89 = scmp.ne.s32.totalorder %s77, %s78
      %p90 = scmp.eq.s32.totalorder %s26, 1
      %p91 = por %p89, %p90
      %p93 = scmp.ne.s32.totalorder %s78, %s92
      %p94 = scmp.eq.s32.totalorder %s26, 0
      %p95 = por %p93, %p94
      %s97 = sadd.s32 %s96, 1
      %p100 = scmp.eq.s32.totalorder %s20, 1
      %p101 = scmp.ne.s32.totalorder %s96, %s98
      %p102 = scmp.eq.s32.totalorder %s20, 0
      %p103 = por %p101, %p102
      %p104 = scmp.ne.s32.totalorder %s96, %s98
      %p105 = scmp.eq.s32.totalorder %s25, 1
      %p106 = por %p104, %p105
      %p107 = scmp.ne.s32.totalorder %s98, %s99
      %p108 = scmp.eq.s32.totalorder %s25, 0
      %p109 = por %p107, %p108
      %p110 = scmp.ne.s32.totalorder %s98, %s99
      %p111 = scmp.eq.s32.totalorder %s26, 1
      %p112 = por %p110, %p111
      %p114 = scmp.ne.s32.totalorder %s99, %s113
      %p115 = scmp.eq.s32.totalorder %s26, 0
      %p116 = por %p114, %p115
      %s118 = sadd.s32 %s117, 1
      %p121 = scmp.eq.s32.totalorder %s20, 1
      %p122 = scmp.ne.s32.totalorder %s117, %s119
      %p123 = scmp.eq.s32.totalorder %s20, 0
      %p124 = por %p122, %p123
      %p125 = scmp.ne.s32.totalorder %s117, %s119
      %p126 = scmp.eq.s32.totalorder %s25, 1
      %p127 = por %p125, %p126
      %p128 = scmp.ne.s32.totalorder %s119, %s120
      %p129 = scmp.eq.s32.totalorder %s25, 0
      %p130 = por %p128, %p129
      %p131 = scmp.ne.s32.totalorder %s119, %s120
      %p132 = scmp.eq.s32.totalorder %s26, 1
      %p133 = por %p131, %p132
      %p135 = scmp.ne.s32.totalorder %s120, %s134
      %p136 = scmp.eq.s32.totalorder %s26, 0
      %p137 = por %p135, %p136
      %s138 = ssub.s32 %s20, %s27
      %p139 = scmp.eq.s32.totalorder %s138, 0
      %s141 = sadd.s32 %s140, 1
      %s142 = scalar_select %p139, %s140, %s141
      %p145 = pneg %p139
      %p146 = scmp.eq.s32.totalorder %s20, 1
      %p147 = por %p145, %p146
      %p148 = scmp.ne.s32.totalorder %s140, %s143
      %p149 = scmp.eq.s32.totalorder %s20, 0
      %p150 = por %p148, %p149
      %p151 = scmp.ne.s32.totalorder %s140, %s143
      %p152 = scmp.eq.s32.totalorder %s25, 1
      %p153 = por %p151, %p152
      %p154 = scmp.ne.s32.totalorder %s143, %s144
      %p155 = scmp.eq.s32.totalorder %s25, 0
      %p156 = por %p154, %p155
      %p157 = scmp.ne.s32.totalorder %s143, %s144
      %p158 = scmp.eq.s32.totalorder %s26, 1
      %p159 = por %p157, %p158
      %p161 = scmp.ne.s32.totalorder %s144, %s160
      %p162 = scmp.eq.s32.totalorder %s26, 0
      %p163 = por %p161, %p162
      %p164 = scmp.le.s32.totalorder 1, %s20
      %p165 = scmp.lt.s32.totalorder %s20, 3
      %p166 = pnand %p164, %p165
      %p167 = pneg %p166
      // Predicated region
      $region9: #{tpu_custom_call.1} parent=5 // pred_check
        _
      $region10: #{tpu_custom_call.1} parent=5 // pred_check_branch
        %169 = sbr.rel (%p166) target = $region12
      $region11: #{tpu_custom_call.1} parent=5 // pred_region
        %s170 = ssub.s32 %s20, 1
        // Predicated region
        $region13: #{tpu_custom_call.1} parent=11 // pred_check
          %p171 = pneg %p67
        $region14: #{tpu_custom_call.1} parent=11 // pred_check_branch
          %173 = sbr.rel (%p171) target = $region16
        $region15: #{tpu_custom_call.1} parent=11 // pred_region
          _
        $region16: #{tpu_custom_call.1} parent=11 // pred_fallthru
          _
        // Predicated region
        $region17: #{tpu_custom_call.1} parent=11 // pred_check
          %p174 = pneg %p88
        $region18: #{tpu_custom_call.1} parent=11 // pred_check_branch
          %176 = sbr.rel (%p174) target = $region20
        $region19: #{tpu_custom_call.1} parent=11 // pred_region
          %178 = vsyncadd [#allocation8], 0
          %s180 = sshll.u32 %s2, 4
          %s181 = int_to_ptr.hbm [resolvable:$true] %s180
          %s182 = sshll.u32 [#allocation7], 4
          %s183 = int_to_ptr.vmem [resolvable:$true] %s182
          %185 = dma.hbm_to_vmem [thread:$0]  %s181, 32, %s183, [#allocation8]
        $region20: #{tpu_custom_call.1} parent=11 // pred_fallthru
          _
        // Predicated region
        $region21: #{tpu_custom_call.1} parent=11 // pred_check
          %p186 = pneg %p109
        $region22: #{tpu_custom_call.1} parent=11 // pred_check_branch
          %188 = sbr.rel (%p186) target = $region24
        $region23: #{tpu_custom_call.1} parent=11 // pred_region
          %190 = vsyncadd [#allocation6], 0
          %s192 = sshll.u32 %s3, 4
          %s193 = int_to_ptr.vmem [resolvable:$true] %s192
          %195 = dma.vmem_to_smem %s193, 16, [#allocation9], [#allocation6]
        $region24: #{tpu_custom_call.1} parent=11 // pred_fallthru
          _
        // Predicated region
        $region25: #{tpu_custom_call.1} parent=11 // pred_check
          %p196 = pneg %p130
        $region26: #{tpu_custom_call.1} parent=11 // pred_check_branch
          %198 = sbr.rel (%p196) target = $region28
        $region27: #{tpu_custom_call.1} parent=11 // pred_region
          _
        $region28: #{tpu_custom_call.1} parent=11 // pred_fallthru
          _
      $region12: #{tpu_custom_call.1} parent=5 // pred_fallthru
        _
      %p199 = scmp.lt.s32.totalorder %s20, 2
      // Predicated region
      $region29: #{tpu_custom_call.1} parent=5 // pred_check
        %p200 = pneg %p199
      $region30: #{tpu_custom_call.1} parent=5 // pred_check_branch
        %202 = sbr.rel (%p200) target = $region32
      $region31: #{tpu_custom_call.1} parent=5 // pred_region
        // Predicated region
        $region33: #{tpu_custom_call.1} parent=31 // pred_check
          %p203 = pneg %p40
        $region34: #{tpu_custom_call.1} parent=31 // pred_check_branch
          %205 = sbr.rel (%p203) target = $region36
        $region35: #{tpu_custom_call.1} parent=31 // pred_region
          %s206 = sand.u32 %s30, 1
          %s207 = scalar_lea.sflag [#allocation4], %s206
          %s208 = sand.u32 %s30, 1
          %s209 = smul.addr %s208, 8
          %s210 = scalar_lea.vmem [#allocation3], %s209
          %212 = vsyncadd %s207, 0
          %s213 = smul.addr %s20, 2
          %s214 = smul.addr %s213, 4
          %s215 = scalar_lea.hbm %s0, %s214
          %s217 = sshll.u32 %s215, 4
          %s218 = int_to_ptr.hbm [resolvable:$true] %s217
          %s219 = sshll.u32 %s210, 4
          %s220 = int_to_ptr.vmem [resolvable:$true] %s219
          %222 = dma.hbm_to_vmem [thread:$0]  %s218, 128, %s220, %s207
        $region36: #{tpu_custom_call.1} parent=31 // pred_fallthru
          _
      $region32: #{tpu_custom_call.1} parent=5 // pred_fallthru
        _
      %p223 = scmp.le.s32.totalorder 1, %s20
      %p224 = scmp.lt.s32.totalorder %s20, 3
      %p225 = pnand %p223, %p224
      %p226 = pneg %p225
      // Predicated region
      $region37: #{tpu_custom_call.1} parent=5 // pred_check
        _
      $region38: #{tpu_custom_call.1} parent=5 // pred_check_branch
        %228 = sbr.rel (%p225) target = $region40
      $region39: #{tpu_custom_call.1} parent=5 // pred_region
        %s229 = ssub.s32 %s20, 1
        %s230 = sand.u32 %s33, 1
        %s231 = scalar_lea.sflag [#allocation4], %s230
        %s232 = sand.u32 %s33, 1
        %s233 = smul.addr %s232, 8
        %s234 = scalar_lea.vmem [#allocation3], %s233
        // Predicated region
        $region41: #{tpu_custom_call.1} parent=39 // pred_check
          %p235 = pneg %p46
        $region42: #{tpu_custom_call.1} parent=39 // pred_check_branch
          %237 = sbr.rel (%p235) target = $region44
        $region43: #{tpu_custom_call.1} parent=39 // pred_region
          %239 = dma.done %s231, 128
        $region44: #{tpu_custom_call.1} parent=39 // pred_fallthru
          _
        // Predicated region
        $region45: #{tpu_custom_call.1} parent=39 // pred_check
          %p240 = pneg %p88
        $region46: #{tpu_custom_call.1} parent=39 // pred_check_branch
          %242 = sbr.rel (%p240) target = $region48
        $region47: #{tpu_custom_call.1} parent=39 // pred_region
          %244 = dma.done [#allocation8], 32
        $region48: #{tpu_custom_call.1} parent=39 // pred_fallthru
          _
        // Predicated region
        $region49: #{tpu_custom_call.1} parent=39 // pred_check
          %p245 = pneg %p109
        $region50: #{tpu_custom_call.1} parent=39 // pred_check_branch
          %247 = sbr.rel (%p245) target = $region52
        $region51: #{tpu_custom_call.1} parent=39 // pred_region
          %249 = dma.done [#allocation6], 16
        $region52: #{tpu_custom_call.1} parent=39 // pred_fallthru
          _
        %250 = sfence
        %s251 = sand.u32 %s33, 1
        %s252 = scalar_lea.sflag [#allocation4], %s251
        %s253 = sand.u32 %s33, 1
        %s254 = smul.addr %s253, 8
        %s255 = scalar_lea.vmem [#allocation3], %s254
        %p256 = pneg %p46
        %p257 = pneg %p43
        %p258 = pneg %p67
        %p259 = pneg %p64
        %p260 = pneg %p88
        %p261 = pneg %p85
        %p262 = pneg %p109
        %p263 = pneg %p106
        %p264 = pneg %p130
        %p265 = pneg %p127
        %p266 = pneg %p156
        %p267 = pneg %p153
        %s268 = sand.u32 %s143, 1
        %s269 = scalar_lea.sflag [#allocation5], %s268
        %s270 = sand.u32 %s143, 1
        %s271 = smul.addr %s270, 8
        %s272 = scalar_lea.vmem [#allocation10], %s271
        %v273 = vld [vmem:[%s234] sm:$0xff]
        %275 = vst [vmem:[#allocation1] ss:$2 sm:$0xff] %v273
        %v276 = vld.sshfl [vmem:[#allocation1] sm:$0xff pattern:$0x75316420]
        %v277 = vld.sshfl [vmem:[#allocation1 + $0x8] sm:$0xff pattern:$0x75316420]
        %vm280 = vcmask 1043456
        %v281 = vsel %vm280, %v276, 0.0
        %v282 = vrot.slane %v281, 4
        %v283 = vadd.f32 %v281, %v282
        %v284 = vrot.slane %v283, 2
        %v285 = vadd.f32 %v283, %v284
        %v286 = vrot.slane %v285, 1
        %v287 = vadd.f32 %v285, %v286
        %v288 = vsel %vm280, %v277, 0.0
        %v289 = vrot.slane %v288, 4
        %v290 = vadd.f32 %v288, %v289
        %v291 = vrot.slane %v290, 2
        %v292 = vadd.f32 %v290, %v291
        %v293 = vrot.slane %v292, 1
        %v294 = vadd.f32 %v292, %v293
        %v295 = vrcp.pop 4.0
        %v296 = vmul.f32 4.0, %v295
        %v297 = vsub.f32 1.0, %v296
        %v298 = vmul.f32 %v295, %v297
        %v299 = vadd.f32 %v295, %v298
        %vm300 = vweird.f32 %v295
        %v301 = vsel %vm300, %v295, %v299
        %v302 = vmul.f32 %v287, %v301
        %v303 = vmul.f32 %v294, %v301
        %304 = vst [vmem:[#allocation1] ss:$2 sm:$0xff] %v273
        %v305 = vld.sshfl [vmem:[#allocation1] sm:$0xff pattern:$0x75316420]
        %v306 = vld.sshfl [vmem:[#allocation1 + $0x8] sm:$0xff pattern:$0x75316420]
        %v309 = vsel %vm280, %v305, -inf
        %v310 = vrot.slane %v309, 4
        %v311 = vmax.f32 %v309, %v310
        %v312 = vrot.slane %v311, 2
        %v313 = vmax.f32 %v311, %v312
        %v314 = vrot.slane %v313, 1
        %v315 = vmax.f32 %v313, %v314
        %v316 = vsel %vm280, %v306, -inf
        %v317 = vrot.slane %v316, 4
        %v318 = vmax.f32 %v316, %v317
        %v319 = vrot.slane %v318, 2
        %v320 = vmax.f32 %v318, %v319
        %v321 = vrot.slane %v320, 1
        %v322 = vmax.f32 %v320, %v321
        %s323 = sld [smem:[#allocation9]]
        %s324 = sld [smem:[#allocation9 + $0x1]]
        %s325 = sld [smem:[#allocation9 + $0x2]]
        %s326 = sld [smem:[#allocation9 + $0x3]]
        %s327 = sld [smem:[#allocation9 + $0x4]]
        %s328 = sld [smem:[#allocation9 + $0x5]]
        %s329 = sld [smem:[#allocation9 + $0x6]]
        %s330 = sld [smem:[#allocation9 + $0x7]]
        %s331 = sld [smem:[#allocation9 + $0x8]]
        %s332 = sld [smem:[#allocation9 + $0x9]]
        %s333 = sld [smem:[#allocation9 + $0xa]]
        %s334 = sld [smem:[#allocation9 + $0xb]]
        %s335 = sld [smem:[#allocation9 + $0xc]]
        %s336 = sld [smem:[#allocation9 + $0xd]]
        %s337 = sld [smem:[#allocation9 + $0xe]]
        %s338 = sld [smem:[#allocation9 + $0xf]]
        %s339 = sld [smem:[#allocation9 + $0x10]]
        %s340 = sld [smem:[#allocation9 + $0x11]]
        %s341 = sld [smem:[#allocation9 + $0x12]]
        %s342 = sld [smem:[#allocation9 + $0x13]]
        %s343 = sld [smem:[#allocation9 + $0x14]]
        %s344 = sld [smem:[#allocation9 + $0x15]]
        %s345 = sld [smem:[#allocation9 + $0x16]]
        %s346 = sld [smem:[#allocation9 + $0x17]]
        %s347 = sld [smem:[#allocation9 + $0x18]]
        %s348 = sld [smem:[#allocation9 + $0x19]]
        %s349 = sld [smem:[#allocation9 + $0x1a]]
        %s350 = sld [smem:[#allocation9 + $0x1b]]
        %s351 = sld [smem:[#allocation9 + $0x1c]]
        %s352 = sld [smem:[#allocation9 + $0x1d]]
        %s353 = sld [smem:[#allocation9 + $0x1e]]
        %s354 = sld [smem:[#allocation9 + $0x1f]]
        %s355 = sld [smem:[#allocation9 + $0x20]]
        %s356 = sld [smem:[#allocation9 + $0x21]]
        %s357 = sld [smem:[#allocation9 + $0x22]]
        %s358 = sld [smem:[#allocation9 + $0x23]]
        %s359 = sld [smem:[#allocation9 + $0x24]]
        %s360 = sld [smem:[#allocation9 + $0x25]]
        %s361 = sld [smem:[#allocation9 + $0x26]]
        %s362 = sld [smem:[#allocation9 + $0x27]]
        %s363 = sld [smem:[#allocation9 + $0x28]]
        %s364 = sld [smem:[#allocation9 + $0x29]]
        %s365 = sld [smem:[#allocation9 + $0x2a]]
        %s366 = sld [smem:[#allocation9 + $0x2b]]
        %s367 = sld [smem:[#allocation9 + $0x2c]]
        %s368 = sld [smem:[#allocation9 + $0x2d]]
        %s369 = sld [smem:[#allocation9 + $0x2e]]
        %s370 = sld [smem:[#allocation9 + $0x2f]]
        %s371 = sld [smem:[#allocation9 + $0x30]]
        %s372 = sld [smem:[#allocation9 + $0x31]]
        %s373 = sld [smem:[#allocation9 + $0x32]]
        %s374 = sld [smem:[#allocation9 + $0x33]]
        %s375 = sld [smem:[#allocation9 + $0x34]]
        %s376 = sld [smem:[#allocation9 + $0x35]]
        %s377 = sld [smem:[#allocation9 + $0x36]]
        %s378 = sld [smem:[#allocation9 + $0x37]]
        %s379 = sld [smem:[#allocation9 + $0x38]]
        %s380 = sld [smem:[#allocation9 + $0x39]]
        %s381 = sld [smem:[#allocation9 + $0x3a]]
        %s382 = sld [smem:[#allocation9 + $0x3b]]
        %s383 = sld [smem:[#allocation9 + $0x3c]]
        %s384 = sld [smem:[#allocation9 + $0x3d]]
        %s385 = sld [smem:[#allocation9 + $0x3e]]
        %s386 = sld [smem:[#allocation9 + $0x3f]]
        %s387 = sld [smem:[#allocation9 + $0x40]]
        %s388 = sld [smem:[#allocation9 + $0x41]]
        %s389 = sld [smem:[#allocation9 + $0x42]]
        %s390 = sld [smem:[#allocation9 + $0x43]]
        %s391 = sld [smem:[#allocation9 + $0x44]]
        %s392 = sld [smem:[#allocation9 + $0x45]]
        %s393 = sld [smem:[#allocation9 + $0x46]]
        %s394 = sld [smem:[#allocation9 + $0x47]]
        %s395 = sld [smem:[#allocation9 + $0x48]]
        %s396 = sld [smem:[#allocation9 + $0x49]]
        %s397 = sld [smem:[#allocation9 + $0x4a]]
        %s398 = sld [smem:[#allocation9 + $0x4b]]
        %s399 = sld [smem:[#allocation9 + $0x4c]]
        %s400 = sld [smem:[#allocation9 + $0x4d]]
        %s401 = sld [smem:[#allocation9 + $0x4e]]
        %s402 = sld [smem:[#allocation9 + $0x4f]]
        %s403 = sld [smem:[#allocation9 + $0x50]]
        %s404 = sld [smem:[#allocation9 + $0x51]]
        %s405 = sld [smem:[#allocation9 + $0x52]]
        %s406 = sld [smem:[#allocation9 + $0x53]]
        %s407 = sld [smem:[#allocation9 + $0x54]]
        %s408 = sld [smem:[#allocation9 + $0x55]]
        %s409 = sld [smem:[#allocation9 + $0x56]]
        %s410 = sld [smem:[#allocation9 + $0x57]]
        %s411 = sld [smem:[#allocation9 + $0x58]]
        %s412 = sld [smem:[#allocation9 + $0x59]]
        %s413 = sld [smem:[#allocation9 + $0x5a]]
        %s414 = sld [smem:[#allocation9 + $0x5b]]
        %s415 = sld [smem:[#allocation9 + $0x5c]]
        %s416 = sld [smem:[#allocation9 + $0x5d]]
        %s417 = sld [smem:[#allocation9 + $0x5e]]
        %s418 = sld [smem:[#allocation9 + $0x5f]]
        %s419 = sld [smem:[#allocation9 + $0x60]]
        %s420 = sld [smem:[#allocation9 + $0x61]]
        %s421 = sld [smem:[#allocation2]]
        %v422 = vld [vmem:[%s1] sm:$0x3]
        %v423 = vld [vmem:[#allocation7] sm:$0x3]
        %424 = vrot.lane.b32.xlu0 %v302, 3
        %v425 = vpop.permute.xlu0 %424
        %426 = vrot.lane.b32.xlu0 %v303, 3
        %v427 = vpop.permute.xlu0 %426
        %v428 = vlaneseq
        %v429 = vand.u32 %v428, 127
        %vm430 = vcmp.lt.s32.totalorder %v429, 3
        %v431 = vsel %vm430, %v425, %v427
        %v432 = vsel %vm430, %v427, %v425
        %433 = vrot.lane.b32.xlu0 %v315, 3
        %v434 = vpop.permute.xlu0 %433
        %435 = vrot.lane.b32.xlu0 %v322, 3
        %v436 = vpop.permute.xlu0 %435
        %v437 = vsel %vm430, %v434, %v436
        %v438 = vsel %vm430, %v436, %v434
        %vm439 = vcmp.ge.s32.totalorder %v423, 3
        %v442 = vrot.slane %v431, 7
        %vm443 = vcmask 1040384
        %v444 = vsel %vm443, %v432, %v442
        %v446 = vsel %vm439, %v444, 0.0
        %v449 = vrot.slane %v437, 7
        %v450 = vsel %vm443, %v438, %v449
        %v452 = vsel %vm439, %v450, 0.0
        %453 = vrot.lane.b32.xlu0 %v302, 2
        %v454 = vpop.permute.xlu0 %453
        %455 = vrot.lane.b32.xlu0 %v303, 2
        %v456 = vpop.permute.xlu0 %455
        %vm457 = vcmp.lt.s32.totalorder %v429, 2
        %v458 = vsel %vm457, %v454, %v456
        %v459 = vsel %vm457, %v456, %v454
        %460 = vrot.lane.b32.xlu0 %v315, 2
        %v461 = vpop.permute.xlu0 %460
        %462 = vrot.lane.b32.xlu0 %v322, 2
        %v463 = vpop.permute.xlu0 %462
        %v464 = vsel %vm457, %v461, %v463
        %v465 = vsel %vm457, %v463, %v461
        %vm466 = vcmp.ge.s32.totalorder %v423, 2
        %v469 = vrot.slane %v458, 7
        %v470 = vsel %vm443, %v459, %v469
        %v472 = vsel %vm466, %v470, 0.0
        %v475 = vrot.slane %v464, 7
        %v476 = vsel %vm443, %v465, %v475
        %v478 = vsel %vm466, %v476, 0.0
        %479 = vrot.lane.b32.xlu0 %v302, 1
        %v480 = vpop.permute.xlu0 %479
        %481 = vrot.lane.b32.xlu0 %v303, 1
        %v482 = vpop.permute.xlu0 %481
        %vm483 = vcmp.lt.s32.totalorder %v429, 1
        %v484 = vsel %vm483, %v480, %v482
        %v485 = vsel %vm483, %v482, %v480
        %486 = vrot.lane.b32.xlu0 %v315, 1
        %v487 = vpop.permute.xlu0 %486
        %488 = vrot.lane.b32.xlu0 %v322, 1
        %v489 = vpop.permute.xlu0 %488
        %v490 = vsel %vm483, %v487, %v489
        %v491 = vsel %vm483, %v489, %v487
        %vm492 = vcmp.ge.s32.totalorder %v423, 1
        %v495 = vrot.slane %v484, 7
        %v496 = vsel %vm443, %v485, %v495
        %v498 = vsel %vm492, %v496, 0.0
        %v501 = vrot.slane %v490, 7
        %v502 = vsel %vm443, %v491, %v501
        %v504 = vsel %vm492, %v502, 0.0
        %505 = vrot.lane.b32.xlu0 %v302, 127
        %v506 = vpop.permute.xlu0 %505
        %507 = vrot.lane.b32.xlu0 %v303, 127
        %v508 = vpop.permute.xlu0 %507
        %vm509 = vcmp.lt.s32.totalorder %v429, 127
        %v510 = vsel %vm509, %v506, %v508
        %v511 = vsel %vm509, %v508, %v506
        %512 = vrot.lane.b32.xlu0 %v315, 127
        %v513 = vpop.permute.xlu0 %512
        %514 = vrot.lane.b32.xlu0 %v322, 127
        %v515 = vpop.permute.xlu0 %514
        %v516 = vsel %vm509, %v513, %v515
        %v517 = vsel %vm509, %v515, %v513
        %vm518 = vcmp.lt.s32.totalorder %v423, 15
        %v521 = vrot.slane %v511, 7
        %v522 = vsel %vm443, %v510, %v521
        %v524 = vsel %vm518, %v522, 0.0
        %v527 = vrot.slane %v517, 7
        %v528 = vsel %vm443, %v516, %v527
        %v530 = vsel %vm518, %v528, 0.0
        %531 = vrot.lane.b32.xlu0 %v302, 126
        %v532 = vpop.permute.xlu0 %531
        %533 = vrot.lane.b32.xlu0 %v303, 126
        %v534 = vpop.permute.xlu0 %533
        %vm535 = vcmp.lt.s32.totalorder %v429, 126
        %v536 = vsel %vm535, %v532, %v534
        %v537 = vsel %vm535, %v534, %v532
        %538 = vrot.lane.b32.xlu0 %v315, 126
        %v539 = vpop.permute.xlu0 %538
        %540 = vrot.lane.b32.xlu0 %v322, 126
        %v541 = vpop.permute.xlu0 %540
        %v542 = vsel %vm535, %v539, %v541
        %v543 = vsel %vm535, %v541, %v539
        %vm544 = vcmp.lt.s32.totalorder %v423, 14
        %v547 = vrot.slane %v537, 7
        %v548 = vsel %vm443, %v536, %v547
        %v550 = vsel %vm544, %v548, 0.0
        %v553 = vrot.slane %v543, 7
        %v554 = vsel %vm443, %v542, %v553
        %v556 = vsel %vm544, %v554, 0.0
        %557 = vrot.lane.b32.xlu0 %v302, 125
        %v558 = vpop.permute.xlu0 %557
        %559 = vrot.lane.b32.xlu0 %v303, 125
        %v560 = vpop.permute.xlu0 %559
        %vm561 = vcmp.lt.s32.totalorder %v429, 125
        %v562 = vsel %vm561, %v558, %v560
        %v563 = vsel %vm561, %v560, %v558
        %564 = vrot.lane.b32.xlu0 %v315, 125
        %v565 = vpop.permute.xlu0 %564
        %566 = vrot.lane.b32.xlu0 %v322, 125
        %v567 = vpop.permute.xlu0 %566
        %v568 = vsel %vm561, %v565, %v567
        %v569 = vsel %vm561, %v567, %v565
        %vm570 = vcmp.lt.s32.totalorder %v423, 13
        %v573 = vrot.slane %v563, 7
        %v574 = vsel %vm443, %v562, %v573
        %v576 = vsel %vm570, %v574, 0.0
        %v579 = vrot.slane %v569, 7
        %v580 = vsel %vm443, %v568, %v579
        %v582 = vsel %vm570, %v580, 0.0
        %v583 = vstv %s323
        %v584 = vmul.f32 %v583, %v446
        %v585 = vstv %s372
        %v586 = vmul.f32 %v585, %v452
        %v587 = vadd.f32 %v584, %v586
        %v588 = vstv %s324
        %v589 = vmul.f32 %v588, %v472
        %v590 = vstv %s373
        %v591 = vmul.f32 %v590, %v478
        %v592 = vadd.f32 %v589, %v591
        %v593 = vstv %s325
        %v594 = vmul.f32 %v593, %v498
        %v595 = vstv %s374
        %v596 = vmul.f32 %v595, %v504
        %v597 = vadd.f32 %v594, %v596
        %v598 = vstv %s326
        %v599 = vmul.f32 %v598, %v302
        %v600 = vmul.f32 %v598, %v303
        %v601 = vstv %s375
        %v602 = vmul.f32 %v601, %v315
        %v603 = vmul.f32 %v601, %v322
        %v604 = vadd.f32 %v599, %v602
        %v605 = vadd.f32 %v600, %v603
        %v606 = vstv %s327
        %v607 = vmul.f32 %v606, %v524
        %v608 = vstv %s376
        %v609 = vmul.f32 %v608, %v530
        %v610 = vadd.f32 %v607, %v609
        %v611 = vstv %s328
        %v612 = vmul.f32 %v611, %v550
        %v613 = vstv %s377
        %v614 = vmul.f32 %v613, %v556
        %v615 = vadd.f32 %v612, %v614
        %v616 = vstv %s329
        %v617 = vmul.f32 %v616, %v576
        %v618 = vstv %s378
        %v619 = vmul.f32 %v618, %v582
        %v620 = vadd.f32 %v617, %v619
        %v621 = vadd.f32 %v587, %v592
        %v624 = vrot.slane %v605, 7
        %v625 = vsel %vm443, %v604, %v624
        %v627 = vadd.f32 %v597, %v625
        %v628 = vadd.f32 %v610, %v615
        %v629 = vadd.f32 %v621, %v627
        %v630 = vadd.f32 %v628, %v620
        %v631 = vadd.f32 %v629, %v630
        %v633 = vperm.slane %v631, 0
        %v634 = vperm.slane %v631, 1
        %637 = vrot.lane.b32.xlu0 %v633, 48
        %v638 = vpop.permute.xlu0 %637
        %639 = vrot.lane.b32.xlu0 %v634, 48
        %v640 = vpop.permute.xlu0 %639
        %vm641 = vcmp.lt.s32.totalorder %v429, 48
        %v642 = vsel %vm641, %v638, %v640
        %v643 = vsel %vm641, %v640, %v638
        %vm644 = vcmp.ge.s32.totalorder %v422, 3
        %v647 = vrot.slane %v642, 7
        %v648 = vsel %vm443, %v643, %v647
        %v650 = vsel %vm644, %v648, 0.0
        %v651 = vstv %s330
        %v652 = vmul.f32 %v651, %v446
        %v653 = vstv %s379
        %v654 = vmul.f32 %v653, %v452
        %v655 = vadd.f32 %v652, %v654
        %v656 = vstv %s331
        %v657 = vmul.f32 %v656, %v472
        %v658 = vstv %s380
        %v659 = vmul.f32 %v658, %v478
        %v660 = vadd.f32 %v657, %v659
        %v661 = vstv %s332
        %v662 = vmul.f32 %v661, %v498
        %v663 = vstv %s381
        %v664 = vmul.f32 %v663, %v504
        %v665 = vadd.f32 %v662, %v664
        %v666 = vstv %s333
        %v667 = vmul.f32 %v666, %v302
        %v668 = vmul.f32 %v666, %v303
        %v669 = vstv %s382
        %v670 = vmul.f32 %v669, %v315
        %v671 = vmul.f32 %v669, %v322
        %v672 = vadd.f32 %v667, %v670
        %v673 = vadd.f32 %v668, %v671
        %v674 = vstv %s334
        %v675 = vmul.f32 %v674, %v524
        %v676 = vstv %s383
        %v677 = vmul.f32 %v676, %v530
        %v678 = vadd.f32 %v675, %v677
        %v679 = vstv %s335
        %v680 = vmul.f32 %v679, %v550
        %v681 = vstv %s384
        %v682 = vmul.f32 %v681, %v556
        %v683 = vadd.f32 %v680, %v682
        %v684 = vstv %s336
        %v685 = vmul.f32 %v684, %v576
        %v686 = vstv %s385
        %v687 = vmul.f32 %v686, %v582
        %v688 = vadd.f32 %v685, %v687
        %v689 = vadd.f32 %v655, %v660
        %v692 = vrot.slane %v673, 7
        %v693 = vsel %vm443, %v672, %v692
        %v695 = vadd.f32 %v665, %v693
        %v696 = vadd.f32 %v678, %v683
        %v697 = vadd.f32 %v689, %v695
        %v698 = vadd.f32 %v696, %v688
        %v699 = vadd.f32 %v697, %v698
        %v701 = vperm.slane %v699, 0
        %v702 = vperm.slane %v699, 1
        %705 = vrot.lane.b32.xlu0 %v701, 32
        %v706 = vpop.permute.xlu0 %705
        %707 = vrot.lane.b32.xlu0 %v702, 32
        %v708 = vpop.permute.xlu0 %707
        %vm709 = vcmp.lt.s32.totalorder %v429, 32
        %v710 = vsel %vm709, %v706, %v708
        %v711 = vsel %vm709, %v708, %v706
        %vm712 = vcmp.ge.s32.totalorder %v422, 2
        %v715 = vrot.slane %v710, 7
        %v716 = vsel %vm443, %v711, %v715
        %v718 = vsel %vm712, %v716, 0.0
        %v719 = vstv %s337
        %v720 = vmul.f32 %v719, %v446
        %v721 = vstv %s386
        %v722 = vmul.f32 %v721, %v452
        %v723 = vadd.f32 %v720, %v722
        %v724 = vstv %s338
        %v725 = vmul.f32 %v724, %v472
        %v726 = vstv %s387
        %v727 = vmul.f32 %v726, %v478
        %v728 = vadd.f32 %v725, %v727
        %v729 = vstv %s339
        %v730 = vmul.f32 %v729, %v498
        %v731 = vstv %s388
        %v732 = vmul.f32 %v731, %v504
        %v733 = vadd.f32 %v730, %v732
        %v734 = vstv %s340
        %v735 = vmul.f32 %v734, %v302
        %v736 = vmul.f32 %v734, %v303
        %v737 = vstv %s389
        %v738 = vmul.f32 %v737, %v315
        %v739 = vmul.f32 %v737, %v322
        %v740 = vadd.f32 %v735, %v738
        %v741 = vadd.f32 %v736, %v739
        %v742 = vstv %s341
        %v743 = vmul.f32 %v742, %v524
        %v744 = vstv %s390
        %v745 = vmul.f32 %v744, %v530
        %v746 = vadd.f32 %v743, %v745
        %v747 = vstv %s342
        %v748 = vmul.f32 %v747, %v550
        %v749 = vstv %s391
        %v750 = vmul.f32 %v749, %v556
        %v751 = vadd.f32 %v748, %v750
        %v752 = vstv %s343
        %v753 = vmul.f32 %v752, %v576
        %v754 = vstv %s392
        %v755 = vmul.f32 %v754, %v582
        %v756 = vadd.f32 %v753, %v755
        %v757 = vadd.f32 %v723, %v728
        %v760 = vrot.slane %v741, 7
        %v761 = vsel %vm443, %v740, %v760
        %v763 = vadd.f32 %v733, %v761
        %v764 = vadd.f32 %v746, %v751
        %v765 = vadd.f32 %v757, %v763
        %v766 = vadd.f32 %v764, %v756
        %v767 = vadd.f32 %v765, %v766
        %v769 = vperm.slane %v767, 0
        %v770 = vperm.slane %v767, 1
        %773 = vrot.lane.b32.xlu0 %v769, 16
        %v774 = vpop.permute.xlu0 %773
        %775 = vrot.lane.b32.xlu0 %v770, 16
        %v776 = vpop.permute.xlu0 %775
        %vm777 = vcmp.lt.s32.totalorder %v429, 16
        %v778 = vsel %vm777, %v774, %v776
        %v779 = vsel %vm777, %v776, %v774
        %vm780 = vcmp.ge.s32.totalorder %v422, 1
        %v783 = vrot.slane %v778, 7
        %v784 = vsel %vm443, %v779, %v783
        %v786 = vsel %vm780, %v784, 0.0
        %v787 = vstv %s344
        %v788 = vmul.f32 %v787, %v446
        %v789 = vstv %s393
        %v790 = vmul.f32 %v789, %v452
        %v791 = vadd.f32 %v788, %v790
        %v792 = vstv %s345
        %v793 = vmul.f32 %v792, %v472
        %v794 = vstv %s394
        %v795 = vmul.f32 %v794, %v478
        %v796 = vadd.f32 %v793, %v795
        %v797 = vstv %s346
        %v798 = vmul.f32 %v797, %v498
        %v799 = vstv %s395
        %v800 = vmul.f32 %v799, %v504
        %v801 = vadd.f32 %v798, %v800
        %v802 = vstv %s347
        %v803 = vmul.f32 %v802, %v302
        %v804 = vmul.f32 %v802, %v303
        %v805 = vstv %s396
        %v806 = vmul.f32 %v805, %v315
        %v807 = vmul.f32 %v805, %v322
        %v808 = vadd.f32 %v803, %v806
        %v809 = vadd.f32 %v804, %v807
        %v810 = vstv %s348
        %v811 = vmul.f32 %v810, %v524
        %v812 = vstv %s397
        %v813 = vmul.f32 %v812, %v530
        %v814 = vadd.f32 %v811, %v813
        %v815 = vstv %s349
        %v816 = vmul.f32 %v815, %v550
        %v817 = vstv %s398
        %v818 = vmul.f32 %v817, %v556
        %v819 = vadd.f32 %v816, %v818
        %v820 = vstv %s350
        %v821 = vmul.f32 %v820, %v576
        %v822 = vstv %s399
        %v823 = vmul.f32 %v822, %v582
        %v824 = vadd.f32 %v821, %v823
        %v825 = vadd.f32 %v791, %v796
        %v828 = vrot.slane %v809, 7
        %v829 = vsel %vm443, %v808, %v828
        %v831 = vadd.f32 %v801, %v829
        %v832 = vadd.f32 %v814, %v819
        %v833 = vadd.f32 %v825, %v831
        %v834 = vadd.f32 %v832, %v824
        %v835 = vadd.f32 %v833, %v834
        %v836 = vstv %s351
        %v837 = vmul.f32 %v836, %v446
        %v838 = vstv %s400
        %v839 = vmul.f32 %v838, %v452
        %v840 = vadd.f32 %v837, %v839
        %v841 = vstv %s352
        %v842 = vmul.f32 %v841, %v472
        %v843 = vstv %s401
        %v844 = vmul.f32 %v843, %v478
        %v845 = vadd.f32 %v842, %v844
        %v846 = vstv %s353
        %v847 = vmul.f32 %v846, %v498
        %v848 = vstv %s402
        %v849 = vmul.f32 %v848, %v504
        %v850 = vadd.f32 %v847, %v849
        %v851 = vstv %s354
        %v852 = vmul.f32 %v851, %v302
        %v853 = vmul.f32 %v851, %v303
        %v854 = vstv %s403
        %v855 = vmul.f32 %v854, %v315
        %v856 = vmul.f32 %v854, %v322
        %v857 = vadd.f32 %v852, %v855
        %v858 = vadd.f32 %v853, %v856
        %v859 = vstv %s355
        %v860 = vmul.f32 %v859, %v524
        %v861 = vstv %s404
        %v862 = vmul.f32 %v861, %v530
        %v863 = vadd.f32 %v860, %v862
        %v864 = vstv %s356
        %v865 = vmul.f32 %v864, %v550
        %v866 = vstv %s405
        %v867 = vmul.f32 %v866, %v556
        %v868 = vadd.f32 %v865, %v867
        %v869 = vstv %s357
        %v870 = vmul.f32 %v869, %v576
        %v871 = vstv %s406
        %v872 = vmul.f32 %v871, %v582
        %v873 = vadd.f32 %v870, %v872
        %v874 = vadd.f32 %v840, %v845
        %v877 = vrot.slane %v858, 7
        %v878 = vsel %vm443, %v857, %v877
        %v880 = vadd.f32 %v850, %v878
        %v881 = vadd.f32 %v863, %v868
        %v882 = vadd.f32 %v874, %v880
        %v883 = vadd.f32 %v881, %v873
        %v884 = vadd.f32 %v882, %v883
        %v886 = vperm.slane %v884, 0
        %v887 = vperm.slane %v884, 1
        %890 = vrot.lane.b32.xlu0 %v886, 112
        %v891 = vpop.permute.xlu0 %890
        %892 = vrot.lane.b32.xlu0 %v887, 112
        %v893 = vpop.permute.xlu0 %892
        %vm894 = vcmp.lt.s32.totalorder %v429, 112
        %v895 = vsel %vm894, %v891, %v893
        %v896 = vsel %vm894, %v893, %v891
        %vm897 = vcmp.lt.s32.totalorder %v422, 15
        %v900 = vrot.slane %v896, 7
        %v901 = vsel %vm443, %v895, %v900
        %v903 = vsel %vm897, %v901, 0.0
        %v904 = vstv %s358
        %v905 = vmul.f32 %v904, %v446
        %v906 = vstv %s407
        %v907 = vmul.f32 %v906, %v452
        %v908 = vadd.f32 %v905, %v907
        %v909 = vstv %s359
        %v910 = vmul.f32 %v909, %v472
        %v911 = vstv %s408
        %v912 = vmul.f32 %v911, %v478
        %v913 = vadd.f32 %v910, %v912
        %v914 = vstv %s360
        %v915 = vmul.f32 %v914, %v498
        %v916 = vstv %s409
        %v917 = vmul.f32 %v916, %v504
        %v918 = vadd.f32 %v915, %v917
        %v919 = vstv %s361
        %v920 = vmul.f32 %v919, %v302
        %v921 = vmul.f32 %v919, %v303
        %v922 = vstv %s410
        %v923 = vmul.f32 %v922, %v315
        %v924 = vmul.f32 %v922, %v322
        %v925 = vadd.f32 %v920, %v923
        %v926 = vadd.f32 %v921, %v924
        %v927 = vstv %s362
        %v928 = vmul.f32 %v927, %v524
        %v929 = vstv %s411
        %v930 = vmul.f32 %v929, %v530
        %v931 = vadd.f32 %v928, %v930
        %v932 = vstv %s363
        %v933 = vmul.f32 %v932, %v550
        %v934 = vstv %s412
        %v935 = vmul.f32 %v934, %v556
        %v936 = vadd.f32 %v933, %v935
        %v937 = vstv %s364
        %v938 = vmul.f32 %v937, %v576
        %v939 = vstv %s413
        %v940 = vmul.f32 %v939, %v582
        %v941 = vadd.f32 %v938, %v940
        %v942 = vadd.f32 %v908, %v913
        %v945 = vrot.slane %v926, 7
        %v946 = vsel %vm443, %v925, %v945
        %v948 = vadd.f32 %v918, %v946
        %v949 = vadd.f32 %v931, %v936
        %v950 = vadd.f32 %v942, %v948
        %v951 = vadd.f32 %v949, %v941
        %v952 = vadd.f32 %v950, %v951
        %v954 = vperm.slane %v952, 0
        %v955 = vperm.slane %v952, 1
        %958 = vrot.lane.b32.xlu0 %v954, 96
        %v959 = vpop.permute.xlu0 %958
        %960 = vrot.lane.b32.xlu0 %v955, 96
        %v961 = vpop.permute.xlu0 %960
        %vm962 = vcmp.lt.s32.totalorder %v429, 96
        %v963 = vsel %vm962, %v959, %v961
        %v964 = vsel %vm962, %v961, %v959
        %vm965 = vcmp.lt.s32.totalorder %v422, 14
        %v968 = vrot.slane %v964, 7
        %v969 = vsel %vm443, %v963, %v968
        %v971 = vsel %vm965, %v969, 0.0
        %v972 = vstv %s365
        %v973 = vmul.f32 %v972, %v446
        %v974 = vstv %s414
        %v975 = vmul.f32 %v974, %v452
        %v976 = vadd.f32 %v973, %v975
        %v977 = vstv %s366
        %v978 = vmul.f32 %v977, %v472
        %v979 = vstv %s415
        %v980 = vmul.f32 %v979, %v478
        %v981 = vadd.f32 %v978, %v980
        %v982 = vstv %s367
        %v983 = vmul.f32 %v982, %v498
        %v984 = vstv %s416
        %v985 = vmul.f32 %v984, %v504
        %v986 = vadd.f32 %v983, %v985
        %v987 = vstv %s368
        %v988 = vmul.f32 %v987, %v302
        %v989 = vmul.f32 %v987, %v303
        %v990 = vstv %s417
        %v991 = vmul.f32 %v990, %v315
        %v992 = vmul.f32 %v990, %v322
        %v993 = vadd.f32 %v988, %v991
        %v994 = vadd.f32 %v989, %v992
        %v995 = vstv %s369
        %v996 = vmul.f32 %v995, %v524
        %v997 = vstv %s418
        %v998 = vmul.f32 %v997, %v530
        %v999 = vadd.f32 %v996, %v998
        %v1000 = vstv %s370
        %v1001 = vmul.f32 %v1000, %v550
        %v1002 = vstv %s419
        %v1003 = vmul.f32 %v1002, %v556
        %v1004 = vadd.f32 %v1001, %v1003
        %v1005 = vstv %s371
        %v1006 = vmul.f32 %v1005, %v576
        %v1007 = vstv %s420
        %v1008 = vmul.f32 %v1007, %v582
        %v1009 = vadd.f32 %v1006, %v1008
        %v1010 = vadd.f32 %v976, %v981
        %v1013 = vrot.slane %v994, 7
        %v1014 = vsel %vm443, %v993, %v1013
        %v1016 = vadd.f32 %v986, %v1014
        %v1017 = vadd.f32 %v999, %v1004
        %v1018 = vadd.f32 %v1010, %v1016
        %v1019 = vadd.f32 %v1017, %v1009
        %v1020 = vadd.f32 %v1018, %v1019
        %v1022 = vperm.slane %v1020, 0
        %v1023 = vperm.slane %v1020, 1
        %1026 = vrot.lane.b32.xlu0 %v1022, 80
        %v1027 = vpop.permute.xlu0 %1026
        %1028 = vrot.lane.b32.xlu0 %v1023, 80
        %v1029 = vpop.permute.xlu0 %1028
        %vm1030 = vcmp.lt.s32.totalorder %v429, 80
        %v1031 = vsel %vm1030, %v1027, %v1029
        %v1032 = vsel %vm1030, %v1029, %v1027
        %vm1033 = vcmp.lt.s32.totalorder %v422, 13
        %v1036 = vrot.slane %v1032, 7
        %v1037 = vsel %vm443, %v1031, %v1036
        %v1039 = vsel %vm1033, %v1037, 0.0
        %v1040 = vadd.f32 %v650, %v718
        %v1041 = vadd.f32 %v786, %v835
        %v1042 = vadd.f32 %v903, %v971
        %v1043 = vadd.f32 %v1040, %v1041
        %v1044 = vadd.f32 %v1042, %v1039
        %v1045 = vadd.f32 %v1043, %v1044
        %v1046 = vstv %s421
        %v1047 = vadd.f32 %v1045, %v1046
        %v1048 = vxor.u32 %v1047, 2147483648
        %v1049 = vmul.f32 %v1048, 1.442695
        %v1050 = vpow.pop %v1049
        %v1051 = vadd.f32 %v1050, 1.0
        %v1052 = vrcp.pop %v1051
        %v1053 = vmul.f32 %v1051, %v1052
        %v1054 = vsub.f32 1.0, %v1053
        %v1055 = vmul.f32 %v1052, %v1054
        %v1056 = vadd.f32 %v1052, %v1055
        %vm1057 = vweird.f32 %v1051
        %vm1058 = vweird.f32 %v1052
        %vm1059 = vmor %vm1057, %vm1058
        %v1060 = vsel %vm1059, %v1052, %v1056
        %v1061 = vand.u32 2147483647, %v1051
        %vm1062 = vcmp.eq.f32.partialorder %v1061, 8.507059e+37
        %v1063 = vand.u32 %v1051, 2147483648
        %v1064 = vor.u32 1.1754944e-38, %v1063
        %v1065 = vsel %vm1062, %v1064, %v1060
        %v1066 = vmul.f32 1.0, %v1065
        %v1068 = vperm.slane %v1066, 0
        %v1069 = vperm.slane %v1066, 1
        %v1070 = vrot.slane %v1069, 4
        %v1071 = vsel %vm280, %v1068, %v1070
        %v1073 = vmul.f32 %v273, %v1071
        %1074 = vst [vmem:[%s272] sm:$0xff] %v1073
        %s1075 = sand.u32 %s143, 1
        %s1076 = scalar_lea.sflag [#allocation5], %s1075
        %s1077 = sand.u32 %s143, 1
        %s1078 = smul.addr %s1077, 8
        %s1079 = scalar_lea.vmem [#allocation10], %s1078
        // Predicated region
        $region53: #{tpu_custom_call.1} parent=39 // pred_check
          %p1080 = pneg %p153
        $region54: #{tpu_custom_call.1} parent=39 // pred_check_branch
          %1082 = sbr.rel (%p1080) target = $region56
        $region55: #{tpu_custom_call.1} parent=39 // pred_region
          %1084 = vsyncadd %s1076, 0
          %s1085 = smul.addr %s25, 2
          %s1086 = smul.addr %s1085, 4
          %s1087 = scalar_lea.hbm %s5, %s1086
          %s1089 = sshll.u32 %s1079, 4
          %s1090 = int_to_ptr.vmem [resolvable:$true] %s1089
          %s1091 = sshll.u32 %s1087, 4
          %s1092 = int_to_ptr.hbm [resolvable:$true] %s1091
          %1094 = dma.vmem_to_hbm [thread:$0]  %s1090, 128, %s1092, %s1076
        $region56: #{tpu_custom_call.1} parent=39 // pred_fallthru
          _
      $region40: #{tpu_custom_call.1} parent=5 // pred_fallthru
        _
      %p1095 = scmp.le.s32.totalorder 2, %s20
      // Predicated region
      $region57: #{tpu_custom_call.1} parent=5 // pred_check
        %p1096 = pneg %p1095
      $region58: #{tpu_custom_call.1} parent=5 // pred_check_branch
        %1098 = sbr.rel (%p1096) target = $region60
      $region59: #{tpu_custom_call.1} parent=5 // pred_region
        %s1099 = ssub.s32 %s20, 2
        // Predicated region
        $region61: #{tpu_custom_call.1} parent=59 // pred_check
          %p1100 = pneg %p159
        $region62: #{tpu_custom_call.1} parent=59 // pred_check_branch
          %1102 = sbr.rel (%p1100) target = $region64
        $region63: #{tpu_custom_call.1} parent=59 // pred_region
          %s1103 = sand.u32 %s144, 1
          %s1104 = scalar_lea.sflag [#allocation5], %s1103
          %s1105 = sand.u32 %s144, 1
          %s1106 = smul.addr %s1105, 8
          %s1107 = scalar_lea.vmem [#allocation10], %s1106
          %1109 = dma.done %s1104, 128
        $region64: #{tpu_custom_call.1} parent=59 // pred_fallthru
          _
      $region60: #{tpu_custom_call.1} parent=5 // pred_fallthru
        _
    $region6: #{tpu_custom_call.1} parent=1 // loop_footer
      %s24 = sadd.s32 1, %s20
    $region7: #{tpu_custom_call.1} parent=1 // loop_footer_branch
      %19 = sbr.rel target = $region3
    $region8: #{tpu_custom_call.1} parent=1 // loop_exit
      _
    %1110 = vsyncpa [#allocation4], 1
    %s1111 = scalar_lea.sflag [#allocation4], 1
    %1112 = vsyncpa %s1111, 1
    %1113 = vsyncpa [#allocation8], 1
    %1114 = vsyncpa [#allocation5], 1
    %s1115 = scalar_lea.sflag [#allocation5], 1
    %1116 = vsyncpa %s1115, 1
    %1117 = vsyncpa [#allocation6], 1
    %s1118 = scalar_lea.sflag [#allocation6], 1
    %1119 = vsyncpa %s1118, 1

</llo_original>
